<compile_context>
chip_gen: v7x
topology: tpu7x:2x2x1
jax: 0.10.0
libtpu: 0.0.40
codegen_flags: <defaults>
</compile_context>

<pallas_src>
import jax
import jax.numpy as jnp
from jax.experimental import pallas as pl
from jax.experimental.pallas import tpu as pltpu


def se_scale_kernel(w_ref, xv_ref, b_ref, feat_ref, out_ref):
    # w_ref:    (Ct, C_in)    1x1 conv weight tile
    # xv_ref:   (C_in, 1)     squeezed conv input (full, replicated per tile)
    # b_ref:    (Ct, 1)       conv bias tile
    # feat_ref: (Ct, H*W)     features to be gated
    # out_ref:  (Ct, H*W)
    logits = jnp.dot(w_ref[...].astype(jnp.float32),
                     xv_ref[...].astype(jnp.float32),
                     preferred_element_type=jnp.float32)             # (Ct, 1)  MXU
    gate = jax.nn.sigmoid(logits + b_ref[...].astype(jnp.float32))    # (Ct, 1)  EUP
    out_ref[...] = (gate * feat_ref[...].astype(jnp.float32)).astype(out_ref.dtype)


def _pick_c_tile(cout, feat_dtype, target_tiles=2):
    """Channel tile: prefer exactly `target_tiles` grid steps (2 -> one per v7x
    TensorCore), then fewer steps (less per-step overhead), then more; the tile
    must respect the dtype's sublane packing or we fall back to full extent."""
    itemsize = jnp.dtype(feat_dtype).itemsize
    packing = {4: 8, 2: 16, 1: 32}.get(itemsize, 8)
    candidates = (target_tiles,
                  *range(target_tiles - 1, 0, -1),
                  *range(target_tiles + 1, 9))
    for nt in candidates:
        if cout % nt == 0 and (cout // nt) % packing == 0:
            return cout // nt
    return cout  # full-extent block is always a legal BlockSpec


def conv2d_sigmoid_mul(x234, x231, w, b, *, donate_features=False):
    """x234: (1, C_in, 1, 1); x231: (1, C_out, H, W);
    w: (C_out, C_in, 1, 1); b: (C_out,)."""
    n_in, cin, _, _ = x234.shape
    n, cout, H, W = x231.shape
    assert n == 1 and n_in == 1, "kernel assumes batch == 1 (reshape to (C, H*W))"
    HW = H * W

    xv = x234.reshape(cin, 1)
    w2 = w.reshape(cout, cin)
    b2 = b.reshape(cout, 1)
    feat = x231.reshape(cout, HW)

    c_tile = _pick_c_tile(cout, x231.dtype, target_tiles=2)
    grid = (cout // c_tile,)

    feat_itemsize = jnp.dtype(x231.dtype).itemsize
    param_bytes = (w2.size * jnp.dtype(w2.dtype).itemsize
                   + xv.size * jnp.dtype(xv.dtype).itemsize
                   + b2.size * jnp.dtype(b2.dtype).itemsize)
    cost = pl.CostEstimate(
        flops=2 * cout * cin + 2 * cout * HW,
        transcendentals=cout,
        bytes_accessed=param_bytes + 2 * cout * HW * feat_itemsize,
    )

    out = pl.pallas_call(
        se_scale_kernel,
        out_shape=jax.ShapeDtypeStruct((cout, HW), x231.dtype),
        grid=grid,
        in_specs=[
            pl.BlockSpec((c_tile, cin), lambda i: (i, 0)),   # weight tile
            pl.BlockSpec((cin, 1), lambda i: (0, 0)),        # conv input (full)
            pl.BlockSpec((c_tile, 1), lambda i: (i, 0)),     # bias tile
            pl.BlockSpec((c_tile, HW), lambda i: (i, 0)),    # feature tile
        ],
        out_specs=pl.BlockSpec((c_tile, HW), lambda i: (i, 0)),
        compiler_params=pltpu.CompilerParams(
            dimension_semantics=("parallel",),
        ),
        cost_estimate=cost,
        input_output_aliases=({3: 0} if donate_features else {}),
    )(w2, xv, b2, feat)

    return out.reshape(n, cout, H, W)


if __name__ == "__main__":
    key = jax.random.PRNGKey(0)
    k1, k2, k3, k4 = jax.random.split(key, 4)

    cin, cout, H, W = 20, 480, 28, 28
    x234 = jax.random.normal(k1, (1, cin, 1, 1), dtype=jnp.float32)
    x231 = jax.random.normal(k2, (1, cout, H, W), dtype=jnp.float32)
    # Deterministic parameter init (synthetic; shapes match Conv2d(20, 480, 1)).
    w = jax.random.normal(k3, (cout, cin, 1, 1), dtype=jnp.float32) * 0.1
    b = jax.random.normal(k4, (cout,), dtype=jnp.float32) * 0.1

    out = conv2d_sigmoid_mul(x234, x231, w, b)
    out = jax.block_until_ready(out)

    # Pure-JAX reference for sanity.
    logits_ref = (w.reshape(cout, cin) @ x234.reshape(cin, 1)) + b.reshape(cout, 1)
    gate_ref = jax.nn.sigmoid(logits_ref).reshape(1, cout, 1, 1)
    ref = gate_ref * x231
    assert out.shape == (1, cout, H, W)
    assert jnp.allclose(out, ref, atol=1e-5, rtol=1e-5)

    print("KERNEL_OK")
</pallas_src>

<mosaic_0001>
module attributes {stable_mosaic.version = 11 : i64} {
  func.func @se_scale_kernel(%arg0: i32, %arg1: memref<240x20xf32, #tpu.memory_space<vmem>>, %arg2: memref<20x1xf32, #tpu.memory_space<vmem>>, %arg3: memref<240x1xf32, #tpu.memory_space<vmem>>, %arg4: memref<240x784xf32, #tpu.memory_space<vmem>>, %arg5: memref<240x784xf32, #tpu.memory_space<vmem>>) attributes {dimension_semantics = [#tpu.dimension_semantics<parallel>], iteration_bounds = array<i64: 2>, scalar_prefetch = 0 : i64, scratch_operands = 0 : i64, tpu.core_type = #tpu.core_type<tc>, window_params = [{transform_indices = @transform_0, window_bounds = array<i64: 240, 20>}, {pipeline_mode = #tpu.pipeline_mode<synchronous>, transform_indices = @transform_1, window_bounds = array<i64: 20, 1>}, {transform_indices = @transform_2, window_bounds = array<i64: 240, 1>}, {transform_indices = @transform_3, window_bounds = array<i64: 240, 784>}, {transform_indices = @transform_4, window_bounds = array<i64: 240, 784>}]} {
    %c0 = arith.constant 0 : index
    %c0_0 = arith.constant 0 : index
    %0 = vector.load %arg1[%c0, %c0_0] : memref<240x20xf32, #tpu.memory_space<vmem>>, vector<240x20xf32>
    %c0_1 = arith.constant 0 : index
    %c0_2 = arith.constant 0 : index
    %1 = vector.load %arg2[%c0_1, %c0_2] : memref<20x1xf32, #tpu.memory_space<vmem>>, vector<20x1xf32>
    %cst = arith.constant dense<0.000000e+00> : vector<240x1xf32>
    %2 = tpu.matmul %0, %1, %cst {dimension_numbers = #tpu.dot_dimension_numbers<[1], [0], [0], [1], [0, 0, 1, 1], [], []>} : vector<240x20xf32>, vector<20x1xf32>, vector<240x1xf32> -> vector<240x1xf32>
    %c0_3 = arith.constant 0 : index
    %c0_4 = arith.constant 0 : index
    %3 = vector.load %arg3[%c0_3, %c0_4] : memref<240x1xf32, #tpu.memory_space<vmem>>, vector<240x1xf32>
    %4 = arith.addf %2, %3 : vector<240x1xf32>
    %5 = arith.negf %4 : vector<240x1xf32>
    %6 = math.exp %5 : vector<240x1xf32>
    %cst_5 = arith.constant 1.000000e+00 : f32
    %7 = vector.broadcast %cst_5 : f32 to vector<240x1xf32>
    %8 = arith.addf %7, %6 : vector<240x1xf32>
    %9 = arith.divf %7, %8 : vector<240x1xf32>
    %c0_6 = arith.constant 0 : index
    %c0_7 = arith.constant 0 : index
    %10 = vector.load %arg4[%c0_6, %c0_7] : memref<240x784xf32, #tpu.memory_space<vmem>>, vector<240x784xf32>
    %11 = vector.broadcast %9 : vector<240x1xf32> to vector<240x784xf32>
    %12 = arith.mulf %11, %10 : vector<240x784xf32>
    %c0_8 = arith.constant 0 : index
    %c0_9 = arith.constant 0 : index
    %13 = vector.load %arg5[%c0_8, %c0_9] : memref<240x784xf32, #tpu.memory_space<vmem>>, vector<240x784xf32>
    tpu.vector_store %arg5[%c0_8, %c0_9], %12 {strides = array<i32>} : memref<240x784xf32, #tpu.memory_space<vmem>>, vector<240x784xf32>,
    return
  }
  func.func @transform_0(%arg0: i32) -> (i32, i32) {
    %c0_i32 = arith.constant 0 : i32
    %c0_i32_0 = arith.constant 0 : i32
    return %arg0, %c0_i32 : i32, i32
  }
  func.func @transform_1(%arg0: i32) -> (i32, i32) {
    %c0_i32 = arith.constant 0 : i32
    %c0_i32_0 = arith.constant 0 : i32
    %c0_i32_1 = arith.constant 0 : i32
    return %c0_i32, %c0_i32_0 : i32, i32
  }
  func.func @transform_2(%arg0: i32) -> (i32, i32) {
    %c0_i32 = arith.constant 0 : i32
    %c0_i32_0 = arith.constant 0 : i32
    return %arg0, %c0_i32 : i32, i32
  }
  func.func @transform_3(%arg0: i32) -> (i32, i32) {
    %c0_i32 = arith.constant 0 : i32
    %c0_i32_0 = arith.constant 0 : i32
    return %arg0, %c0_i32 : i32, i32
  }
  func.func @transform_4(%arg0: i32) -> (i32, i32) {
    %c0_i32 = arith.constant 0 : i32
    %c0_i32_0 = arith.constant 0 : i32
    return %arg0, %c0_i32 : i32, i32
  }
}

</mosaic_0001>

<llo_original>
// kernel: tpu_custom_call.1
$region0: #{tpu_custom_call.1}
  #allocation0 [shape = 'u32[]', space=smem, size = 0x4, offset = 0x4, fixed_abs, tag = 'smem constant byte address 0x4 - core index']
  #allocation1 [shape = 'u32[144,128]{1,0:T(1,128)}', space=vmem, size = 0x12000, scoped, tag = 'internal scratch']
  %s0 = inlined_call_operand.vmem [shape: f32[480,20], index: 0, kind: input, shape index: {}]
  %s1 = inlined_call_operand.vmem [shape: f32[20,1], index: 1, kind: input, shape index: {}]
  %s2 = inlined_call_operand.vmem [shape: f32[480,1], index: 2, kind: input, shape index: {}]
  %s3 = inlined_call_operand.vmem [shape: f32[480,784], index: 3, kind: input, shape index: {}]
  %s4 = inlined_call_operand.vmem [shape: f32[480,784], index: 4, kind: output, shape index: {}]
  %s5 = sld [smem:[#allocation0]]
  $region49: #{tpu_custom_call.1} parent=0
    _
  %s7 = ssub.s32 1, %s5
  %s8 = scalar_select 0, %s7, %s5
  loop: start=0, step=1, limit=4
  $region2: #{tpu_custom_call.1} parent=0 // loop_pre_header
    _
  $region3: #{tpu_custom_call.1} parent=0 // loop_header
    %s10 = sphi 0, %s14
    %p11 = scmp.ge.s32.totalorder %s10, 4
    %s20 = sphi 0, %s22
    %s23 = sphi 0, %s20
    %s24 = sphi 0, %s23
    %s40 = sphi 0, %s24
    %s44 = sphi 0, %s44
    %s46 = sphi 0, %s44
    %s47 = sphi 0, %s46
    %s61 = sphi 0, %s47
    %s67 = sphi 0, %s69
    %s70 = sphi 0, %s67
    %s71 = sphi 0, %s70
    %s87 = sphi 0, %s71
    %s93 = sphi 0, %s95
    %s96 = sphi 0, %s93
    %s97 = sphi 0, %s96
    %s113 = sphi 0, %s97
    %s119 = sphi 0, %s121
    %s122 = sphi 0, %s119
    %s123 = sphi 0, %s122
    %s139 = sphi 0, %s123
  $region4: #{tpu_custom_call.1} parent=0 // loop_header_branch
    %13 = sbr.rel (%p11) target = $region8
  $region5: #{tpu_custom_call.1} parent=0 // loop_body
    %s15 = ssub.s32 %s10, 1
    %s16 = ssub.s32 %s10, 2
    %s17 = sadd.s32 %s10, 1
    %s18 = ssub.s32 %s10, %s17
    %p19 = scmp.eq.s32.totalorder %s18, 0
    %s21 = sadd.s32 %s20, 1
    %s22 = scalar_select %p19, %s20, %s21
    %p25 = pneg %p19
    %p26 = scmp.eq.s32.totalorder %s10, 1
    %p27 = por %p25, %p26
    %p28 = scmp.ne.s32.totalorder %s20, %s23
    %p29 = scmp.eq.s32.totalorder %s10, 0
    %p30 = por %p28, %p29
    %p31 = scmp.ne.s32.totalorder %s20, %s23
    %p32 = scmp.eq.s32.totalorder %s15, 1
    %p33 = por %p31, %p32
    %p34 = scmp.ne.s32.totalorder %s23, %s24
    %p35 = scmp.eq.s32.totalorder %s15, 0
    %p36 = por %p34, %p35
    %p37 = scmp.ne.s32.totalorder %s23, %s24
    %p38 = scmp.eq.s32.totalorder %s16, 1
    %p39 = por %p37, %p38
    %p41 = scmp.ne.s32.totalorder %s24, %s40
    %p42 = scmp.eq.s32.totalorder %s16, 0
    %p43 = por %p41, %p42
    %s45 = sadd.s32 %s44, 1
    %p48 = scmp.eq.s32.totalorder %s10, 1
    %p49 = scmp.ne.s32.totalorder %s44, %s46
    %p50 = scmp.eq.s32.totalorder %s10, 0
    %p51 = por %p49, %p50
    %p52 = scmp.ne.s32.totalorder %s44, %s46
    %p53 = scmp.eq.s32.totalorder %s15, 1
    %p54 = por %p52, %p53
    %p55 = scmp.ne.s32.totalorder %s46, %s47
    %p56 = scmp.eq.s32.totalorder %s15, 0
    %p57 = por %p55, %p56
    %p58 = scmp.ne.s32.totalorder %s46, %s47
    %p59 = scmp.eq.s32.totalorder %s16, 1
    %p60 = por %p58, %p59
    %p62 = scmp.ne.s32.totalorder %s47, %s61
    %p63 = scmp.eq.s32.totalorder %s16, 0
    %p64 = por %p62, %p63
    %s65 = ssub.s32 %s10, %s17
    %p66 = scmp.eq.s32.totalorder %s65, 0
    %s68 = sadd.s32 %s67, 1
    %s69 = scalar_select %p66, %s67, %s68
    %p72 = pneg %p66
    %p73 = scmp.eq.s32.totalorder %s10, 1
    %p74 = por %p72, %p73
    %p75 = scmp.ne.s32.totalorder %s67, %s70
    %p76 = scmp.eq.s32.totalorder %s10, 0
    %p77 = por %p75, %p76
    %p78 = scmp.ne.s32.totalorder %s67, %s70
    %p79 = scmp.eq.s32.totalorder %s15, 1
    %p80 = por %p78, %p79
    %p81 = scmp.ne.s32.totalorder %s70, %s71
    %p82 = scmp.eq.s32.totalorder %s15, 0
    %p83 = por %p81, %p82
    %p84 = scmp.ne.s32.totalorder %s70, %s71
    %p85 = scmp.eq.s32.totalorder %s16, 1
    %p86 = por %p84, %p85
    %p88 = scmp.ne.s32.totalorder %s71, %s87
    %p89 = scmp.eq.s32.totalorder %s16, 0
    %p90 = por %p88, %p89
    %s91 = ssub.s32 %s10, %s17
    %p92 = scmp.eq.s32.totalorder %s91, 0
    %s94 = sadd.s32 %s93, 1
    %s95 = scalar_select %p92, %s93, %s94
    %p98 = pneg %p92
    %p99 = scmp.eq.s32.totalorder %s10, 1
    %p100 = por %p98, %p99
    %p101 = scmp.ne.s32.totalorder %s93, %s96
    %p102 = scmp.eq.s32.totalorder %s10, 0
    %p103 = por %p101, %p102
    %p104 = scmp.ne.s32.totalorder %s93, %s96
    %p105 = scmp.eq.s32.totalorder %s15, 1
    %p106 = por %p104, %p105
    %p107 = scmp.ne.s32.totalorder %s96, %s97
    %p108 = scmp.eq.s32.totalorder %s15, 0
    %p109 = por %p107, %p108
    %p110 = scmp.ne.s32.totalorder %s96, %s97
    %p111 = scmp.eq.s32.totalorder %s16, 1
    %p112 = por %p110, %p111
    %p114 = scmp.ne.s32.totalorder %s97, %s113
    %p115 = scmp.eq.s32.totalorder %s16, 0
    %p116 = por %p114, %p115
    %s117 = ssub.s32 %s10, %s17
    %p118 = scmp.eq.s32.totalorder %s117, 0
    %s120 = sadd.s32 %s119, 1
    %s121 = scalar_select %p118, %s119, %s120
    %p124 = pneg %p118
    %p125 = scmp.eq.s32.totalorder %s10, 1
    %p126 = por %p124, %p125
    %p127 = scmp.ne.s32.totalorder %s119, %s122
    %p128 = scmp.eq.s32.totalorder %s10, 0
    %p129 = por %p127, %p128
    %p130 = scmp.ne.s32.totalorder %s119, %s122
    %p131 = scmp.eq.s32.totalorder %s15, 1
    %p132 = por %p130, %p131
    %p133 = scmp.ne.s32.totalorder %s122, %s123
    %p134 = scmp.eq.s32.totalorder %s15, 0
    %p135 = por %p133, %p134
    %p136 = scmp.ne.s32.totalorder %s122, %s123
    %p137 = scmp.eq.s32.totalorder %s16, 1
    %p138 = por %p136, %p137
    %p140 = scmp.ne.s32.totalorder %s123, %s139
    %p141 = scmp.eq.s32.totalorder %s16, 0
    %p142 = por %p140, %p141
    %p143 = scmp.le.s32.totalorder 1, %s10
    %p144 = scmp.lt.s32.totalorder %s10, 3
    %p145 = pnand %p143, %p144
    %p146 = pneg %p145
    // Predicated region
    $region9: #{tpu_custom_call.1} parent=5 // pred_check
      _
    $region10: #{tpu_custom_call.1} parent=5 // pred_check_branch
      %148 = sbr.rel (%p145) target = $region12
    $region11: #{tpu_custom_call.1} parent=5 // pred_region
      %s149 = ssub.s32 %s10, 1
      // Predicated region
      $region13: #{tpu_custom_call.1} parent=11 // pred_check
        %p150 = pneg %p57
      $region14: #{tpu_custom_call.1} parent=11 // pred_check_branch
        %152 = sbr.rel (%p150) target = $region16
      $region15: #{tpu_custom_call.1} parent=11 // pred_region
        _
      $region16: #{tpu_custom_call.1} parent=11 // pred_fallthru
        _
    $region12: #{tpu_custom_call.1} parent=5 // pred_fallthru
      _
    %p153 = scmp.lt.s32.totalorder %s10, 2
    // Predicated region
    $region17: #{tpu_custom_call.1} parent=5 // pred_check
      %p154 = pneg %p153
    $region18: #{tpu_custom_call.1} parent=5 // pred_check_branch
      %156 = sbr.rel (%p154) target = $region20
    $region19: #{tpu_custom_call.1} parent=5 // pred_region
      // Predicated region
      $region21: #{tpu_custom_call.1} parent=19 // pred_check
        %p157 = pneg %p30
      $region22: #{tpu_custom_call.1} parent=19 // pred_check_branch
        %159 = sbr.rel (%p157) target = $region24
      $region23: #{tpu_custom_call.1} parent=19 // pred_region
        %s160 = smul.u32 30, %s10
        %p161 = scmp.lt.s32.totalorder %s160, 59
        %s162 = scalar_select %p161, %s160, 59
        %s163 = smul.addr %s162, 8
        %s164 = scalar_lea.vmem %s0, %s163
        %s165 = smul.u32 30, %s10
      $region24: #{tpu_custom_call.1} parent=19 // pred_fallthru
        _
      // Predicated region
      $region25: #{tpu_custom_call.1} parent=19 // pred_check
        %p166 = pneg %p77
      $region26: #{tpu_custom_call.1} parent=19 // pred_check_branch
        %168 = sbr.rel (%p166) target = $region28
      $region27: #{tpu_custom_call.1} parent=19 // pred_region
        %s169 = smul.u32 30, %s10
        %p170 = scmp.lt.s32.totalorder %s169, 59
        %s171 = scalar_select %p170, %s169, 59
        %s172 = smul.addr %s171, 8
        %s173 = scalar_lea.vmem %s2, %s172
        %s174 = smul.u32 30, %s10
      $region28: #{tpu_custom_call.1} parent=19 // pred_fallthru
        _
      // Predicated region
      $region29: #{tpu_custom_call.1} parent=19 // pred_check
        %p175 = pneg %p103
      $region30: #{tpu_custom_call.1} parent=19 // pred_check_branch
        %177 = sbr.rel (%p175) target = $region32
      $region31: #{tpu_custom_call.1} parent=19 // pred_region
        %s178 = smul.u32 30, %s10
        %p179 = scmp.lt.s32.totalorder %s178, 59
        %s180 = scalar_select %p179, %s178, 59
        %s181 = smul.addr %s180, 7
        %s182 = smul.addr %s181, 8
        %s183 = scalar_lea.vmem %s3, %s182
        %s184 = smul.u32 30, %s10
      $region32: #{tpu_custom_call.1} parent=19 // pred_fallthru
        _
    $region20: #{tpu_custom_call.1} parent=5 // pred_fallthru
      _
    %p185 = scmp.le.s32.totalorder 1, %s10
    %p186 = scmp.lt.s32.totalorder %s10, 3
    %p187 = pnand %p185, %p186
    %p188 = pneg %p187
    // Predicated region
    $region33: #{tpu_custom_call.1} parent=5 // pred_check
      _
    $region34: #{tpu_custom_call.1} parent=5 // pred_check_branch
      %190 = sbr.rel (%p187) target = $region36
    $region35: #{tpu_custom_call.1} parent=5 // pred_region
      %s191 = ssub.s32 %s10, 1
      %s192 = smul.u32 30, %s15
      %p193 = scmp.lt.s32.totalorder %s192, 59
      %s194 = scalar_select %p193, %s192, 59
      %s195 = smul.addr %s194, 8
      %s196 = scalar_lea.vmem %s0, %s195
      %p197 = pneg %p36
      %p198 = pneg %p33
      %p199 = pneg %p57
      %p200 = pneg %p54
      %s201 = smul.u32 30, %s15
      %p202 = scmp.lt.s32.totalorder %s201, 59
      %s203 = scalar_select %p202, %s201, 59
      %s204 = smul.addr %s203, 8
      %s205 = scalar_lea.vmem %s2, %s204
      %p206 = pneg %p83
      %p207 = pneg %p80
      %s208 = smul.u32 30, %s15
      %p209 = scmp.lt.s32.totalorder %s208, 59
      %s210 = scalar_select %p209, %s208, 59
      %s211 = smul.addr %s210, 7
      %s212 = smul.addr %s211, 8
      %s213 = scalar_lea.vmem %s3, %s212
      %p214 = pneg %p109
      %p215 = pneg %p106
      %p216 = pneg %p135
      %p217 = pneg %p132
      %s218 = smul.u32 30, %s15
      %p219 = scmp.lt.s32.totalorder %s218, 59
      %s220 = scalar_select %p219, %s218, 59
      %s221 = smul.addr %s220, 7
      %s222 = smul.addr %s221, 8
      %s223 = scalar_lea.vmem %s4, %s222
      %s224 = smul.u32 30, %s15
      %p225 = scmp.lt.s32.totalorder %s224, 59
      %s226 = scalar_select %p225, %s224, 59
      %s227 = smul.addr %s226, 8
      %s228 = scalar_lea.vmem %s0, %s227
      %s229 = smul.u32 30, %s15
      %s230 = smul.u32 30, %s15
      %p231 = scmp.lt.s32.totalorder %s230, 59
      %s232 = scalar_select %p231, %s230, 59
      %s233 = smul.addr %s232, 8
      %s234 = scalar_lea.vmem %s2, %s233
      %s235 = smul.u32 30, %s15
      %s236 = smul.u32 30, %s15
      %p237 = scmp.lt.s32.totalorder %s236, 59
      %s238 = scalar_select %p237, %s236, 59
      %s239 = smul.addr %s238, 7
      %s240 = smul.addr %s239, 8
      %s241 = scalar_lea.vmem %s3, %s240
      %s242 = smul.u32 30, %s15
      %s243 = smul.u32 30, %s15
      %p244 = scmp.lt.s32.totalorder %s243, 59
      %s245 = scalar_select %p244, %s243, 59
      %s246 = smul.addr %s245, 7
      %s247 = smul.addr %s246, 8
      %s248 = scalar_lea.vmem %s4, %s247
      %s249 = smul.u32 30, %s15
      %v250 = vld [vmem:[%s228] sm:$0xff]
      %v251 = vld [vmem:[%s228 + $0x8] sm:$0xff]
      %v252 = vld [vmem:[%s228 + $0x10] sm:$0xff]
      %v253 = vld [vmem:[%s228 + $0x18] sm:$0xff]
      %v254 = vld [vmem:[%s228 + $0x20] sm:$0xff]
      %v255 = vld [vmem:[%s228 + $0x28] sm:$0xff]
      %v256 = vld [vmem:[%s228 + $0x30] sm:$0xff]
      %v257 = vld [vmem:[%s228 + $0x38] sm:$0xff]
      %v258 = vld [vmem:[%s228 + $0x40] sm:$0xff]
      %v259 = vld [vmem:[%s228 + $0x48] sm:$0xff]
      %v260 = vld [vmem:[%s228 + $0x50] sm:$0xff]
      %v261 = vld [vmem:[%s228 + $0x58] sm:$0xff]
      %v262 = vld [vmem:[%s228 + $0x60] sm:$0xff]
      %v263 = vld [vmem:[%s228 + $0x68] sm:$0xff]
      %v264 = vld [vmem:[%s228 + $0x70] sm:$0xff]
      %v265 = vld [vmem:[%s228 + $0x78] sm:$0xff]
      %v266 = vld [vmem:[%s228 + $0x80] sm:$0xff]
      %v267 = vld [vmem:[%s228 + $0x88] sm:$0xff]
      %v268 = vld [vmem:[%s228 + $0x90] sm:$0xff]
      %v269 = vld [vmem:[%s228 + $0x98] sm:$0xff]
      %v270 = vld [vmem:[%s228 + $0xa0] sm:$0xff]
      %v271 = vld [vmem:[%s228 + $0xa8] sm:$0xff]
      %v272 = vld [vmem:[%s228 + $0xb0] sm:$0xff]
      %v273 = vld [vmem:[%s228 + $0xb8] sm:$0xff]
      %v274 = vld [vmem:[%s228 + $0xc0] sm:$0xff]
      %v275 = vld [vmem:[%s228 + $0xc8] sm:$0xff]
      %v276 = vld [vmem:[%s228 + $0xd0] sm:$0xff]
      %v277 = vld [vmem:[%s228 + $0xd8] sm:$0xff]
      %v278 = vld [vmem:[%s228 + $0xe0] sm:$0xff]
      %v279 = vld [vmem:[%s228 + $0xe8] sm:$0xff]
      %v280 = vld [vmem:[%s1] sm:$0xff]
      %v281 = vld [vmem:[%s1 + $0x8] sm:$0xff]
      %v282 = vld [vmem:[%s1 + $0x10] sm:$0xf]
      %v283 = vld [vmem:[%s234] sm:$0xff]
      %v284 = vld [vmem:[%s234 + $0x8] sm:$0xff]
      %v285 = vld [vmem:[%s234 + $0x10] sm:$0xff]
      %v286 = vld [vmem:[%s234 + $0x18] sm:$0xff]
      %v287 = vld [vmem:[%s234 + $0x20] sm:$0xff]
      %v288 = vld [vmem:[%s234 + $0x28] sm:$0xff]
      %v289 = vld [vmem:[%s234 + $0x30] sm:$0xff]
      %v290 = vld [vmem:[%s234 + $0x38] sm:$0xff]
      %v291 = vld [vmem:[%s234 + $0x40] sm:$0xff]
      %v292 = vld [vmem:[%s234 + $0x48] sm:$0xff]
      %v293 = vld [vmem:[%s234 + $0x50] sm:$0xff]
      %v294 = vld [vmem:[%s234 + $0x58] sm:$0xff]
      %v295 = vld [vmem:[%s234 + $0x60] sm:$0xff]
      %v296 = vld [vmem:[%s234 + $0x68] sm:$0xff]
      %v297 = vld [vmem:[%s234 + $0x70] sm:$0xff]
      %v298 = vld [vmem:[%s234 + $0x78] sm:$0xff]
      %v299 = vld [vmem:[%s234 + $0x80] sm:$0xff]
      %v300 = vld [vmem:[%s234 + $0x88] sm:$0xff]
      %v301 = vld [vmem:[%s234 + $0x90] sm:$0xff]
      %v302 = vld [vmem:[%s234 + $0x98] sm:$0xff]
      %v303 = vld [vmem:[%s234 + $0xa0] sm:$0xff]
      %v304 = vld [vmem:[%s234 + $0xa8] sm:$0xff]
      %v305 = vld [vmem:[%s234 + $0xb0] sm:$0xff]
      %v306 = vld [vmem:[%s234 + $0xb8] sm:$0xff]
      %v307 = vld [vmem:[%s234 + $0xc0] sm:$0xff]
      %v308 = vld [vmem:[%s234 + $0xc8] sm:$0xff]
      %v309 = vld [vmem:[%s234 + $0xd0] sm:$0xff]
      %v310 = vld [vmem:[%s234 + $0xd8] sm:$0xff]
      %v311 = vld [vmem:[%s234 + $0xe0] sm:$0xff]
      %v312 = vld [vmem:[%s234 + $0xe8] sm:$0xff]
      %vm313 = vcmask 162816
      %v315 = vsel %vm313, %v250, 0
      %v318 = vsel %vm313, %v251, 0
      %v321 = vsel %vm313, %v252, 0
      %v324 = vsel %vm313, %v253, 0
      %v327 = vsel %vm313, %v254, 0
      %v330 = vsel %vm313, %v255, 0
      %v333 = vsel %vm313, %v256, 0
      %v336 = vsel %vm313, %v257, 0
      %v339 = vsel %vm313, %v258, 0
      %v342 = vsel %vm313, %v259, 0
      %v345 = vsel %vm313, %v260, 0
      %v348 = vsel %vm313, %v261, 0
      %v351 = vsel %vm313, %v262, 0
      %v354 = vsel %vm313, %v263, 0
      %v357 = vsel %vm313, %v264, 0
      %v360 = vsel %vm313, %v265, 0
      %v363 = vsel %vm313, %v266, 0
      %v366 = vsel %vm313, %v267, 0
      %v369 = vsel %vm313, %v268, 0
      %v372 = vsel %vm313, %v269, 0
      %v375 = vsel %vm313, %v270, 0
      %v378 = vsel %vm313, %v271, 0
      %v381 = vsel %vm313, %v272, 0
      %v384 = vsel %vm313, %v273, 0
      %v387 = vsel %vm313, %v274, 0
      %v390 = vsel %vm313, %v275, 0
      %v393 = vsel %vm313, %v276, 0
      %v396 = vsel %vm313, %v277, 0
      %v399 = vsel %vm313, %v278, 0
      %v402 = vsel %vm313, %v279, 0
      %vm404 = vcmask 1043456
      %v406 = vsel %vm404, %v282, 0
      %408 = vmatprep.subr.mxu0 0.0
      %409 = vmatpush1.msra.mxu0 %v280
      %410 = vmatprep.subr.mxu0 0.0
      %411 = vmatpush1.msra.mxu0 %v281
      %412 = vmatprep.subr.mxu0 0.0
      %413 = vmatpush1.msra.mxu0 %v406
      %414 = vmatprep.subr.mxu0 0.0
      %415 = vmatpush1.msra.mxu0 0.0
      %416 = vmatprep.subr.mxu0 0.0
      %417 = vmatpush1.msra.mxu0 0.0
      %418 = vmatprep.subr.mxu0 0.0
      %419 = vmatpush1.msra.mxu0 0.0
      %420 = vmatprep.subr.mxu0 0.0
      %421 = vmatpush1.msra.mxu0 0.0
      %422 = vmatprep.subr.mxu0 0.0
      %423 = vmatpush1.msra.mxu0 0.0
      %424 = vmatprep.subr.mxu0 0.0
      %425 = vmatpush1.msra.mxu0 0.0
      %426 = vmatprep.subr.mxu0 0.0
      %427 = vmatpush1.msra.mxu0 0.0
      %428 = vmatprep.subr.mxu0 0.0
      %429 = vmatpush1.msra.mxu0 0.0
      %430 = vmatprep.subr.mxu0 0.0
      %431 = vmatpush1.msra.mxu0 0.0
      %432 = vmatprep.subr.mxu0 0.0
      %433 = vmatpush1.msra.mxu0 0.0
      %434 = vmatprep.subr.mxu0 0.0
      %435 = vmatpush1.msra.mxu0 0.0
      %436 = vmatprep.subr.mxu0 0.0
      %437 = vmatpush1.msra.mxu0 0.0
      %438 = vmatprep.subr.mxu0 0.0
      %439 = vmatpush1.msra.mxu0 0.0
      %440 = vmatprep.subr.mxu0 0.0
      %441 = vmatpush1.msra.mxu0 0.0
      %442 = vmatprep.subr.mxu0 0.0
      %443 = vmatpush1.msra.mxu0 0.0
      %444 = vmatprep.subr.mxu0 0.0
      %445 = vmatpush1.msra.mxu0 0.0
      %446 = vmatprep.subr.mxu0 0.0
      %447 = vmatpush1.msra.mxu0 0.0
      %448 = vmatprep.subr.mxu0 0.0
      %449 = vmatpush1.msra.mxu0 0.0
      %450 = vmatprep.subr.mxu0 0.0
      %451 = vmatpush1.msra.mxu0 0.0
      %452 = vmatprep.subr.mxu0 0.0
      %453 = vmatpush1.msra.mxu0 0.0
      %454 = vmatprep.subr.mxu0 0.0
      %455 = vmatpush1.msra.mxu0 0.0
      %456 = vmatprep.subr.mxu0 0.0
      %457 = vmatpush1.msra.mxu0 0.0
      %458 = vmatprep.subr.mxu0 0.0
      %459 = vmatpush1.msra.mxu0 0.0
      %460 = vmatprep.subr.mxu0 0.0
      %461 = vmatpush1.msra.mxu0 0.0
      %462 = vmatprep.subr.mxu0 0.0
      %463 = vmatpush1.msra.mxu0 0.0
      %464 = vmatprep.subr.mxu0 0.0
      %465 = vmatpush1.msra.mxu0 0.0
      %466 = vmatprep.subr.mxu0 0.0
      %467 = vmatpush1.msra.mxu0 0.0
      %468 = vmatprep.subr.mxu0 0.0
      %469 = vmatpush1.msra.mxu0 0.0
      %470 = vmatprep.subr.mxu0 0.0
      %471 = vmatpush1.msra.mxu0 0.0
      %472 = vmatprep.mubr.f32.mxu0 0.0
      %473 = vmatmul.mubr.f32.gmra.mrb[0].mxu0 %v315
      %v474 = vpop.f32.mrb[0].mxu0
      %v475 = vadd.f32 %v283, %v474
      %v476 = vpop.f32.mrb[0].mxu0
      %477 = vmatprep.mubr.f32.mxu0 0.0
      %478 = vmatmul.mubr.f32.gmra.mrb[0].mxu0 %v318
      %v479 = vpop.f32.mrb[0].mxu0
      %v480 = vadd.f32 %v284, %v479
      %v481 = vpop.f32.mrb[0].mxu0
      %482 = vmatprep.mubr.f32.mxu0 0.0
      %483 = vmatmul.mubr.f32.gmra.mrb[0].mxu0 %v321
      %v484 = vpop.f32.mrb[0].mxu0
      %v485 = vadd.f32 %v285, %v484
      %v486 = vpop.f32.mrb[0].mxu0
      %487 = vmatprep.mubr.f32.mxu0 0.0
      %488 = vmatmul.mubr.f32.gmra.mrb[0].mxu0 %v324
      %v489 = vpop.f32.mrb[0].mxu0
      %v490 = vadd.f32 %v286, %v489
      %v491 = vpop.f32.mrb[0].mxu0
      %492 = vmatprep.mubr.f32.mxu0 0.0
      %493 = vmatmul.mubr.f32.gmra.mrb[0].mxu0 %v327
      %v494 = vpop.f32.mrb[0].mxu0
      %v495 = vadd.f32 %v287, %v494
      %v496 = vpop.f32.mrb[0].mxu0
      %497 = vmatprep.mubr.f32.mxu0 0.0
      %498 = vmatmul.mubr.f32.gmra.mrb[0].mxu0 %v330
      %v499 = vpop.f32.mrb[0].mxu0
      %v500 = vadd.f32 %v288, %v499
      %v501 = vpop.f32.mrb[0].mxu0
      %502 = vmatprep.mubr.f32.mxu0 0.0
      %503 = vmatmul.mubr.f32.gmra.mrb[0].mxu0 %v333
      %v504 = vpop.f32.mrb[0].mxu0
      %v505 = vadd.f32 %v289, %v504
      %v506 = vpop.f32.mrb[0].mxu0
      %507 = vmatprep.mubr.f32.mxu0 0.0
      %508 = vmatmul.mubr.f32.gmra.mrb[0].mxu0 %v336
      %v509 = vpop.f32.mrb[0].mxu0
      %v510 = vadd.f32 %v290, %v509
      %v511 = vpop.f32.mrb[0].mxu0
      %512 = vmatprep.mubr.f32.mxu0 0.0
      %513 = vmatmul.mubr.f32.gmra.mrb[0].mxu0 %v339
      %v514 = vpop.f32.mrb[0].mxu0
      %v515 = vadd.f32 %v291, %v514
      %v516 = vpop.f32.mrb[0].mxu0
      %517 = vmatprep.mubr.f32.mxu0 0.0
      %518 = vmatmul.mubr.f32.gmra.mrb[0].mxu0 %v342
      %v519 = vpop.f32.mrb[0].mxu0
      %v520 = vadd.f32 %v292, %v519
      %v521 = vpop.f32.mrb[0].mxu0
      %522 = vmatprep.mubr.f32.mxu0 0.0
      %523 = vmatmul.mubr.f32.gmra.mrb[0].mxu0 %v345
      %v524 = vpop.f32.mrb[0].mxu0
      %v525 = vadd.f32 %v293, %v524
      %v526 = vpop.f32.mrb[0].mxu0
      %527 = vmatprep.mubr.f32.mxu0 0.0
      %528 = vmatmul.mubr.f32.gmra.mrb[0].mxu0 %v348
      %v529 = vpop.f32.mrb[0].mxu0
      %v530 = vadd.f32 %v294, %v529
      %v531 = vpop.f32.mrb[0].mxu0
      %532 = vmatprep.mubr.f32.mxu0 0.0
      %533 = vmatmul.mubr.f32.gmra.mrb[0].mxu0 %v351
      %v534 = vpop.f32.mrb[0].mxu0
      %v535 = vadd.f32 %v295, %v534
      %v536 = vpop.f32.mrb[0].mxu0
      %537 = vmatprep.mubr.f32.mxu0 0.0
      %538 = vmatmul.mubr.f32.gmra.mrb[0].mxu0 %v354
      %v539 = vpop.f32.mrb[0].mxu0
      %v540 = vadd.f32 %v296, %v539
      %v541 = vpop.f32.mrb[0].mxu0
      %542 = vmatprep.mubr.f32.mxu0 0.0
      %543 = vmatmul.mubr.f32.gmra.mrb[0].mxu0 %v357
      %v544 = vpop.f32.mrb[0].mxu0
      %v545 = vadd.f32 %v297, %v544
      %v546 = vpop.f32.mrb[0].mxu0
      %547 = vmatprep.mubr.f32.mxu0 0.0
      %548 = vmatmul.mubr.f32.gmra.mrb[0].mxu0 %v360
      %v549 = vpop.f32.mrb[0].mxu0
      %v550 = vadd.f32 %v298, %v549
      %v551 = vpop.f32.mrb[0].mxu0
      %552 = vmatprep.mubr.f32.mxu0 0.0
      %553 = vmatmul.mubr.f32.gmra.mrb[0].mxu0 %v363
      %v554 = vpop.f32.mrb[0].mxu0
      %v555 = vadd.f32 %v299, %v554
      %v556 = vpop.f32.mrb[0].mxu0
      %557 = vmatprep.mubr.f32.mxu0 0.0
      %558 = vmatmul.mubr.f32.gmra.mrb[0].mxu0 %v366
      %v559 = vpop.f32.mrb[0].mxu0
      %v560 = vadd.f32 %v300, %v559
      %v561 = vpop.f32.mrb[0].mxu0
      %562 = vmatprep.mubr.f32.mxu0 0.0
      %563 = vmatmul.mubr.f32.gmra.mrb[0].mxu0 %v369
      %v564 = vpop.f32.mrb[0].mxu0
      %v565 = vadd.f32 %v301, %v564
      %v566 = vpop.f32.mrb[0].mxu0
      %567 = vmatprep.mubr.f32.mxu0 0.0
      %568 = vmatmul.mubr.f32.gmra.mrb[0].mxu0 %v372
      %v569 = vpop.f32.mrb[0].mxu0
      %v570 = vadd.f32 %v302, %v569
      %v571 = vpop.f32.mrb[0].mxu0
      %572 = vmatprep.mubr.f32.mxu0 0.0
      %573 = vmatmul.mubr.f32.gmra.mrb[0].mxu0 %v375
      %v574 = vpop.f32.mrb[0].mxu0
      %v575 = vadd.f32 %v303, %v574
      %v576 = vpop.f32.mrb[0].mxu0
      %577 = vmatprep.mubr.f32.mxu0 0.0
      %578 = vmatmul.mubr.f32.gmra.mrb[0].mxu0 %v378
      %v579 = vpop.f32.mrb[0].mxu0
      %v580 = vadd.f32 %v304, %v579
      %v581 = vpop.f32.mrb[0].mxu0
      %582 = vmatprep.mubr.f32.mxu0 0.0
      %583 = vmatmul.mubr.f32.gmra.mrb[0].mxu0 %v381
      %v584 = vpop.f32.mrb[0].mxu0
      %v585 = vadd.f32 %v305, %v584
      %v586 = vpop.f32.mrb[0].mxu0
      %587 = vmatprep.mubr.f32.mxu0 0.0
      %588 = vmatmul.mubr.f32.gmra.mrb[0].mxu0 %v384
      %v589 = vpop.f32.mrb[0].mxu0
      %v590 = vadd.f32 %v306, %v589
      %v591 = vpop.f32.mrb[0].mxu0
      %592 = vmatprep.mubr.f32.mxu0 0.0
      %593 = vmatmul.mubr.f32.gmra.mrb[0].mxu0 %v387
      %v594 = vpop.f32.mrb[0].mxu0
      %v595 = vadd.f32 %v307, %v594
      %v596 = vpop.f32.mrb[0].mxu0
      %597 = vmatprep.mubr.f32.mxu0 0.0
      %598 = vmatmul.mubr.f32.gmra.mrb[0].mxu0 %v390
      %v599 = vpop.f32.mrb[0].mxu0
      %v600 = vadd.f32 %v308, %v599
      %v601 = vpop.f32.mrb[0].mxu0
      %602 = vmatprep.mubr.f32.mxu0 0.0
      %603 = vmatmul.mubr.f32.gmra.mrb[0].mxu0 %v393
      %v604 = vpop.f32.mrb[0].mxu0
      %v605 = vadd.f32 %v309, %v604
      %v606 = vpop.f32.mrb[0].mxu0
      %607 = vmatprep.mubr.f32.mxu0 0.0
      %608 = vmatmul.mubr.f32.gmra.mrb[0].mxu0 %v396
      %v609 = vpop.f32.mrb[0].mxu0
      %v610 = vadd.f32 %v310, %v609
      %v611 = vpop.f32.mrb[0].mxu0
      %612 = vmatprep.mubr.f32.mxu0 0.0
      %613 = vmatmul.mubr.f32.gmra.mrb[0].mxu0 %v399
      %v614 = vpop.f32.mrb[0].mxu0
      %v615 = vadd.f32 %v311, %v614
      %v616 = vpop.f32.mrb[0].mxu0
      %617 = vmatprep.mubr.f32.mxu0 0.0
      %618 = vmatmul.mubr.f32.gmra.mrb[0].mxu0 %v402
      %v619 = vpop.f32.mrb[0].mxu0
      %v620 = vadd.f32 %v312, %v619
      %v621 = vpop.f32.mrb[0].mxu0
      %622 = vdwg.mxu0
      %v623 = vxor.u32 %v475, 2147483648
      %v624 = vxor.u32 %v480, 2147483648
      %v625 = vxor.u32 %v485, 2147483648
      %v626 = vxor.u32 %v490, 2147483648
      %v627 = vxor.u32 %v495, 2147483648
      %v628 = vxor.u32 %v500, 2147483648
      %v629 = vxor.u32 %v505, 2147483648
      %v630 = vxor.u32 %v510, 2147483648
      %v631 = vxor.u32 %v515, 2147483648
      %v632 = vxor.u32 %v520, 2147483648
      %v633 = vxor.u32 %v525, 2147483648
      %v634 = vxor.u32 %v530, 2147483648
      %v635 = vxor.u32 %v535, 2147483648
      %v636 = vxor.u32 %v540, 2147483648
      %v637 = vxor.u32 %v545, 2147483648
      %v638 = vxor.u32 %v550, 2147483648
      %v639 = vxor.u32 %v555, 2147483648
      %v640 = vxor.u32 %v560, 2147483648
      %v641 = vxor.u32 %v565, 2147483648
      %v642 = vxor.u32 %v570, 2147483648
      %v643 = vxor.u32 %v575, 2147483648
      %v644 = vxor.u32 %v580, 2147483648
      %v645 = vxor.u32 %v585, 2147483648
      %v646 = vxor.u32 %v590, 2147483648
      %v647 = vxor.u32 %v595, 2147483648
      %v648 = vxor.u32 %v600, 2147483648
      %v649 = vxor.u32 %v605, 2147483648
      %v650 = vxor.u32 %v610, 2147483648
      %v651 = vxor.u32 %v615, 2147483648
      %v652 = vxor.u32 %v620, 2147483648
      %v653 = vmul.f32 %v623, 1.442695
      %v654 = vpow.pop %v653
      %v655 = vmul.f32 %v624, 1.442695
      %v656 = vpow.pop %v655
      %v657 = vmul.f32 %v625, 1.442695
      %v658 = vpow.pop %v657
      %v659 = vmul.f32 %v626, 1.442695
      %v660 = vpow.pop %v659
      %v661 = vmul.f32 %v627, 1.442695
      %v662 = vpow.pop %v661
      %v663 = vmul.f32 %v628, 1.442695
      %v664 = vpow.pop %v663
      %v665 = vmul.f32 %v629, 1.442695
      %v666 = vpow.pop %v665
      %v667 = vmul.f32 %v630, 1.442695
      %v668 = vpow.pop %v667
      %v669 = vmul.f32 %v631, 1.442695
      %v670 = vpow.pop %v669
      %v671 = vmul.f32 %v632, 1.442695
      %v672 = vpow.pop %v671
      %v673 = vmul.f32 %v633, 1.442695
      %v674 = vpow.pop %v673
      %v675 = vmul.f32 %v634, 1.442695
      %v676 = vpow.pop %v675
      %v677 = vmul.f32 %v635, 1.442695
      %v678 = vpow.pop %v677
      %v679 = vmul.f32 %v636, 1.442695
      %v680 = vpow.pop %v679
      %v681 = vmul.f32 %v637, 1.442695
      %v682 = vpow.pop %v681
      %v683 = vmul.f32 %v638, 1.442695
      %v684 = vpow.pop %v683
      %v685 = vmul.f32 %v639, 1.442695
      %v686 = vpow.pop %v685
      %v687 = vmul.f32 %v640, 1.442695
      %v688 = vpow.pop %v687
      %v689 = vmul.f32 %v641, 1.442695
      %v690 = vpow.pop %v689
      %v691 = vmul.f32 %v642, 1.442695
      %v692 = vpow.pop %v691
      %v693 = vmul.f32 %v643, 1.442695
      %v694 = vpow.pop %v693
      %v695 = vmul.f32 %v644, 1.442695
      %v696 = vpow.pop %v695
      %v697 = vmul.f32 %v645, 1.442695
      %v698 = vpow.pop %v697
      %v699 = vmul.f32 %v646, 1.442695
      %v700 = vpow.pop %v699
      %v701 = vmul.f32 %v647, 1.442695
      %v702 = vpow.pop %v701
      %v703 = vmul.f32 %v648, 1.442695
      %v704 = vpow.pop %v703
      %v705 = vmul.f32 %v649, 1.442695
      %v706 = vpow.pop %v705
      %v707 = vmul.f32 %v650, 1.442695
      %v708 = vpow.pop %v707
      %v709 = vmul.f32 %v651, 1.442695
      %v710 = vpow.pop %v709
      %v711 = vmul.f32 %v652, 1.442695
      %v712 = vpow.pop %v711
      %v713 = vadd.f32 %v654, 1.0
      %v714 = vadd.f32 %v656, 1.0
      %v715 = vadd.f32 %v658, 1.0
      %v716 = vadd.f32 %v660, 1.0
      %v717 = vadd.f32 %v662, 1.0
      %v718 = vadd.f32 %v664, 1.0
      %v719 = vadd.f32 %v666, 1.0
      %v720 = vadd.f32 %v668, 1.0
      %v721 = vadd.f32 %v670, 1.0
      %v722 = vadd.f32 %v672, 1.0
      %v723 = vadd.f32 %v674, 1.0
      %v724 = vadd.f32 %v676, 1.0
      %v725 = vadd.f32 %v678, 1.0
      %v726 = vadd.f32 %v680, 1.0
      %v727 = vadd.f32 %v682, 1.0
      %v728 = vadd.f32 %v684, 1.0
      %v729 = vadd.f32 %v686, 1.0
      %v730 = vadd.f32 %v688, 1.0
      %v731 = vadd.f32 %v690, 1.0
      %v732 = vadd.f32 %v692, 1.0
      %v733 = vadd.f32 %v694, 1.0
      %v734 = vadd.f32 %v696, 1.0
      %v735 = vadd.f32 %v698, 1.0
      %v736 = vadd.f32 %v700, 1.0
      %v737 = vadd.f32 %v702, 1.0
      %v738 = vadd.f32 %v704, 1.0
      %v739 = vadd.f32 %v706, 1.0
      %v740 = vadd.f32 %v708, 1.0
      %v741 = vadd.f32 %v710, 1.0
      %v742 = vadd.f32 %v712, 1.0
      %v743 = vrcp.pop %v713
      %v744 = vmul.f32 1.0, %v743
      %v745 = vrcp.pop %v714
      %v746 = vmul.f32 1.0, %v745
      %v747 = vrcp.pop %v715
      %v748 = vmul.f32 1.0, %v747
      %v749 = vrcp.pop %v716
      %v750 = vmul.f32 1.0, %v749
      %v751 = vrcp.pop %v717
      %v752 = vmul.f32 1.0, %v751
      %v753 = vrcp.pop %v718
      %v754 = vmul.f32 1.0, %v753
      %v755 = vrcp.pop %v719
      %v756 = vmul.f32 1.0, %v755
      %v757 = vrcp.pop %v720
      %v758 = vmul.f32 1.0, %v757
      %v759 = vrcp.pop %v721
      %v760 = vmul.f32 1.0, %v759
      %v761 = vrcp.pop %v722
      %v762 = vmul.f32 1.0, %v761
      %v763 = vrcp.pop %v723
      %v764 = vmul.f32 1.0, %v763
      %v765 = vrcp.pop %v724
      %v766 = vmul.f32 1.0, %v765
      %v767 = vrcp.pop %v725
      %v768 = vmul.f32 1.0, %v767
      %v769 = vrcp.pop %v726
      %v770 = vmul.f32 1.0, %v769
      %v771 = vrcp.pop %v727
      %v772 = vmul.f32 1.0, %v771
      %v773 = vrcp.pop %v728
      %v774 = vmul.f32 1.0, %v773
      %v775 = vrcp.pop %v729
      %v776 = vmul.f32 1.0, %v775
      %v777 = vrcp.pop %v730
      %v778 = vmul.f32 1.0, %v777
      %v779 = vrcp.pop %v731
      %v780 = vmul.f32 1.0, %v779
      %v781 = vrcp.pop %v732
      %v782 = vmul.f32 1.0, %v781
      %v783 = vrcp.pop %v733
      %v784 = vmul.f32 1.0, %v783
      %v785 = vrcp.pop %v734
      %v786 = vmul.f32 1.0, %v785
      %v787 = vrcp.pop %v735
      %v788 = vmul.f32 1.0, %v787
      %v789 = vrcp.pop %v736
      %v790 = vmul.f32 1.0, %v789
      %v791 = vrcp.pop %v737
      %v792 = vmul.f32 1.0, %v791
      %v793 = vrcp.pop %v738
      %v794 = vmul.f32 1.0, %v793
      %v795 = vrcp.pop %v739
      %v796 = vmul.f32 1.0, %v795
      %v797 = vrcp.pop %v740
      %v798 = vmul.f32 1.0, %v797
      %v799 = vrcp.pop %v741
      %v800 = vmul.f32 1.0, %v799
      %v801 = vrcp.pop %v742
      %v802 = vmul.f32 1.0, %v801
      %v803 = vld [vmem:[%s241] sm:$0xff]
      %v804 = vld [vmem:[%s241 + $0x8] sm:$0xff]
      %v805 = vld [vmem:[%s241 + $0x10] sm:$0xff]
      %v806 = vld [vmem:[%s241 + $0x18] sm:$0xff]
      %v807 = vld [vmem:[%s241 + $0x20] sm:$0xff]
      %v808 = vld [vmem:[%s241 + $0x28] sm:$0xff]
      %v809 = vld [vmem:[%s241 + $0x30] sm:$0xff]
      %v810 = vld [vmem:[%s241 + $0x38] sm:$0xff]
      %v811 = vld [vmem:[%s241 + $0x40] sm:$0xff]
      %v812 = vld [vmem:[%s241 + $0x48] sm:$0xff]
      %v813 = vld [vmem:[%s241 + $0x50] sm:$0xff]
      %v814 = vld [vmem:[%s241 + $0x58] sm:$0xff]
      %v815 = vld [vmem:[%s241 + $0x60] sm:$0xff]
      %v816 = vld [vmem:[%s241 + $0x68] sm:$0xff]
      %v817 = vld [vmem:[%s241 + $0x70] sm:$0xff]
      %v818 = vld [vmem:[%s241 + $0x78] sm:$0xff]
      %v819 = vld [vmem:[%s241 + $0x80] sm:$0xff]
      %v820 = vld [vmem:[%s241 + $0x88] sm:$0xff]
      %v821 = vld [vmem:[%s241 + $0x90] sm:$0xff]
      %v822 = vld [vmem:[%s241 + $0x98] sm:$0xff]
      %v823 = vld [vmem:[%s241 + $0xa0] sm:$0xff]
      %v824 = vld [vmem:[%s241 + $0xa8] sm:$0xff]
      %v825 = vld [vmem:[%s241 + $0xb0] sm:$0xff]
      %v826 = vld [vmem:[%s241 + $0xb8] sm:$0xff]
      %v827 = vld [vmem:[%s241 + $0xc0] sm:$0xff]
      %v828 = vld [vmem:[%s241 + $0xc8] sm:$0xff]
      %v829 = vld [vmem:[%s241 + $0xd0] sm:$0xff]
      %v830 = vld [vmem:[%s241 + $0xd8] sm:$0xff]
      %v831 = vld [vmem:[%s241 + $0xe0] sm:$0xff]
      %v832 = vld [vmem:[%s241 + $0xe8] sm:$0xff]
      %v833 = vld [vmem:[%s241 + $0xf0] sm:$0xff]
      %v834 = vld [vmem:[%s241 + $0xf8] sm:$0xff]
      %v835 = vld [vmem:[%s241 + $0x100] sm:$0xff]
      %v836 = vld [vmem:[%s241 + $0x108] sm:$0xff]
      %v837 = vld [vmem:[%s241 + $0x110] sm:$0xff]
      %v838 = vld [vmem:[%s241 + $0x118] sm:$0xff]
      %v839 = vld [vmem:[%s241 + $0x120] sm:$0xff]
      %v840 = vld [vmem:[%s241 + $0x128] sm:$0xff]
      %v841 = vld [vmem:[%s241 + $0x130] sm:$0xff]
      %v842 = vld [vmem:[%s241 + $0x138] sm:$0xff]
      %v843 = vld [vmem:[%s241 + $0x140] sm:$0xff]
      %v844 = vld [vmem:[%s241 + $0x148] sm:$0xff]
      %v845 = vld [vmem:[%s241 + $0x150] sm:$0xff]
      %v846 = vld [vmem:[%s241 + $0x158] sm:$0xff]
      %v847 = vld [vmem:[%s241 + $0x160] sm:$0xff]
      %v848 = vld [vmem:[%s241 + $0x168] sm:$0xff]
      %v849 = vld [vmem:[%s241 + $0x170] sm:$0xff]
      %v850 = vld [vmem:[%s241 + $0x178] sm:$0xff]
      %v851 = vld [vmem:[%s241 + $0x180] sm:$0xff]
      %v852 = vld [vmem:[%s241 + $0x188] sm:$0xff]
      %v853 = vld [vmem:[%s241 + $0x190] sm:$0xff]
      %v854 = vld [vmem:[%s241 + $0x198] sm:$0xff]
      %v855 = vld [vmem:[%s241 + $0x1a0] sm:$0xff]
      %v856 = vld [vmem:[%s241 + $0x1a8] sm:$0xff]
      %v857 = vld [vmem:[%s241 + $0x1b0] sm:$0xff]
      %v858 = vld [vmem:[%s241 + $0x1b8] sm:$0xff]
      %v859 = vld [vmem:[%s241 + $0x1c0] sm:$0xff]
      %v860 = vld [vmem:[%s241 + $0x1c8] sm:$0xff]
      %v861 = vld [vmem:[%s241 + $0x1d0] sm:$0xff]
      %v862 = vld [vmem:[%s241 + $0x1d8] sm:$0xff]
      %v863 = vld [vmem:[%s241 + $0x1e0] sm:$0xff]
      %v864 = vld [vmem:[%s241 + $0x1e8] sm:$0xff]
      %v865 = vld [vmem:[%s241 + $0x1f0] sm:$0xff]
      %v866 = vld [vmem:[%s241 + $0x1f8] sm:$0xff]
      %v867 = vld [vmem:[%s241 + $0x200] sm:$0xff]
      %v868 = vld [vmem:[%s241 + $0x208] sm:$0xff]
      %v869 = vld [vmem:[%s241 + $0x210] sm:$0xff]
      %v870 = vld [vmem:[%s241 + $0x218] sm:$0xff]
      %v871 = vld [vmem:[%s241 + $0x220] sm:$0xff]
      %v872 = vld [vmem:[%s241 + $0x228] sm:$0xff]
      %v873 = vld [vmem:[%s241 + $0x230] sm:$0xff]
      %v874 = vld [vmem:[%s241 + $0x238] sm:$0xff]
      %v875 = vld [vmem:[%s241 + $0x240] sm:$0xff]
      %v876 = vld [vmem:[%s241 + $0x248] sm:$0xff]
      %v877 = vld [vmem:[%s241 + $0x250] sm:$0xff]
      %v878 = vld [vmem:[%s241 + $0x258] sm:$0xff]
      %v879 = vld [vmem:[%s241 + $0x260] sm:$0xff]
      %v880 = vld [vmem:[%s241 + $0x268] sm:$0xff]
      %v881 = vld [vmem:[%s241 + $0x270] sm:$0xff]
      %v882 = vld [vmem:[%s241 + $0x278] sm:$0xff]
      %v883 = vld [vmem:[%s241 + $0x280] sm:$0xff]
      %v884 = vld [vmem:[%s241 + $0x288] sm:$0xff]
      %v885 = vld [vmem:[%s241 + $0x290] sm:$0xff]
      %v886 = vld [vmem:[%s241 + $0x298] sm:$0xff]
      %v887 = vld [vmem:[%s241 + $0x2a0] sm:$0xff]
      %v888 = vld [vmem:[%s241 + $0x2a8] sm:$0xff]
      %v889 = vld [vmem:[%s241 + $0x2b0] sm:$0xff]
      %v890 = vld [vmem:[%s241 + $0x2b8] sm:$0xff]
      %v891 = vld [vmem:[%s241 + $0x2c0] sm:$0xff]
      %v892 = vld [vmem:[%s241 + $0x2c8] sm:$0xff]
      %v893 = vld [vmem:[%s241 + $0x2d0] sm:$0xff]
      %v894 = vld [vmem:[%s241 + $0x2d8] sm:$0xff]
      %v895 = vld [vmem:[%s241 + $0x2e0] sm:$0xff]
      %v896 = vld [vmem:[%s241 + $0x2e8] sm:$0xff]
      %v897 = vld [vmem:[%s241 + $0x2f0] sm:$0xff]
      %v898 = vld [vmem:[%s241 + $0x2f8] sm:$0xff]
      %v899 = vld [vmem:[%s241 + $0x300] sm:$0xff]
      %v900 = vld [vmem:[%s241 + $0x308] sm:$0xff]
      %v901 = vld [vmem:[%s241 + $0x310] sm:$0xff]
      %v902 = vld [vmem:[%s241 + $0x318] sm:$0xff]
      %v903 = vld [vmem:[%s241 + $0x320] sm:$0xff]
      %v904 = vld [vmem:[%s241 + $0x328] sm:$0xff]
      %v905 = vld [vmem:[%s241 + $0x330] sm:$0xff]
      %v906 = vld [vmem:[%s241 + $0x338] sm:$0xff]
      %v907 = vld [vmem:[%s241 + $0x340] sm:$0xff]
      %v908 = vld [vmem:[%s241 + $0x348] sm:$0xff]
      %v909 = vld [vmem:[%s241 + $0x350] sm:$0xff]
      %v910 = vld [vmem:[%s241 + $0x358] sm:$0xff]
      %v911 = vld [vmem:[%s241 + $0x360] sm:$0xff]
      %v912 = vld [vmem:[%s241 + $0x368] sm:$0xff]
      %v913 = vld [vmem:[%s241 + $0x370] sm:$0xff]
      %v914 = vld [vmem:[%s241 + $0x378] sm:$0xff]
      %v915 = vld [vmem:[%s241 + $0x380] sm:$0xff]
      %v916 = vld [vmem:[%s241 + $0x388] sm:$0xff]
      %v917 = vld [vmem:[%s241 + $0x390] sm:$0xff]
      %v918 = vld [vmem:[%s241 + $0x398] sm:$0xff]
      %v919 = vld [vmem:[%s241 + $0x3a0] sm:$0xff]
      %v920 = vld [vmem:[%s241 + $0x3a8] sm:$0xff]
      %v921 = vld [vmem:[%s241 + $0x3b0] sm:$0xff]
      %v922 = vld [vmem:[%s241 + $0x3b8] sm:$0xff]
      %v923 = vld [vmem:[%s241 + $0x3c0] sm:$0xff]
      %v924 = vld [vmem:[%s241 + $0x3c8] sm:$0xff]
      %v925 = vld [vmem:[%s241 + $0x3d0] sm:$0xff]
      %v926 = vld [vmem:[%s241 + $0x3d8] sm:$0xff]
      %v927 = vld [vmem:[%s241 + $0x3e0] sm:$0xff]
      %v928 = vld [vmem:[%s241 + $0x3e8] sm:$0xff]
      %v929 = vld [vmem:[%s241 + $0x3f0] sm:$0xff]
      %v930 = vld [vmem:[%s241 + $0x3f8] sm:$0xff]
      %v931 = vld [vmem:[%s241 + $0x400] sm:$0xff]
      %v932 = vld [vmem:[%s241 + $0x408] sm:$0xff]
      %v933 = vld [vmem:[%s241 + $0x410] sm:$0xff]
      %v934 = vld [vmem:[%s241 + $0x418] sm:$0xff]
      %v935 = vld [vmem:[%s241 + $0x420] sm:$0xff]
      %v936 = vld [vmem:[%s241 + $0x428] sm:$0xff]
      %v937 = vld [vmem:[%s241 + $0x430] sm:$0xff]
      %v938 = vld [vmem:[%s241 + $0x438] sm:$0xff]
      %v939 = vld [vmem:[%s241 + $0x440] sm:$0xff]
      %v940 = vld [vmem:[%s241 + $0x448] sm:$0xff]
      %v941 = vld [vmem:[%s241 + $0x450] sm:$0xff]
      %v942 = vld [vmem:[%s241 + $0x458] sm:$0xff]
      %v943 = vld [vmem:[%s241 + $0x460] sm:$0xff]
      %v944 = vld [vmem:[%s241 + $0x468] sm:$0xff]
      %v945 = vld [vmem:[%s241 + $0x470] sm:$0xff]
      %v946 = vld [vmem:[%s241 + $0x478] sm:$0xff]
      %v947 = vld [vmem:[%s241 + $0x480] sm:$0xff]
      %v948 = vld [vmem:[%s241 + $0x488] sm:$0xff]
      %v949 = vld [vmem:[%s241 + $0x490] sm:$0xff]
      %v950 = vld [vmem:[%s241 + $0x498] sm:$0xff]
      %v951 = vld [vmem:[%s241 + $0x4a0] sm:$0xff]
      %v952 = vld [vmem:[%s241 + $0x4a8] sm:$0xff]
      %v953 = vld [vmem:[%s241 + $0x4b0] sm:$0xff]
      %v954 = vld [vmem:[%s241 + $0x4b8] sm:$0xff]
      %v955 = vld [vmem:[%s241 + $0x4c0] sm:$0xff]
      %v956 = vld [vmem:[%s241 + $0x4c8] sm:$0xff]
      %v957 = vld [vmem:[%s241 + $0x4d0] sm:$0xff]
      %v958 = vld [vmem:[%s241 + $0x4d8] sm:$0xff]
      %v959 = vld [vmem:[%s241 + $0x4e0] sm:$0xff]
      %v960 = vld [vmem:[%s241 + $0x4e8] sm:$0xff]
      %v961 = vld [vmem:[%s241 + $0x4f0] sm:$0xff]
      %v962 = vld [vmem:[%s241 + $0x4f8] sm:$0xff]
      %v963 = vld [vmem:[%s241 + $0x500] sm:$0xff]
      %v964 = vld [vmem:[%s241 + $0x508] sm:$0xff]
      %v965 = vld [vmem:[%s241 + $0x510] sm:$0xff]
      %v966 = vld [vmem:[%s241 + $0x518] sm:$0xff]
      %v967 = vld [vmem:[%s241 + $0x520] sm:$0xff]
      %v968 = vld [vmem:[%s241 + $0x528] sm:$0xff]
      %v969 = vld [vmem:[%s241 + $0x530] sm:$0xff]
      %v970 = vld [vmem:[%s241 + $0x538] sm:$0xff]
      %v971 = vld [vmem:[%s241 + $0x540] sm:$0xff]
      %v972 = vld [vmem:[%s241 + $0x548] sm:$0xff]
      %v973 = vld [vmem:[%s241 + $0x550] sm:$0xff]
      %v974 = vld [vmem:[%s241 + $0x558] sm:$0xff]
      %v975 = vld [vmem:[%s241 + $0x560] sm:$0xff]
      %v976 = vld [vmem:[%s241 + $0x568] sm:$0xff]
      %v977 = vld [vmem:[%s241 + $0x570] sm:$0xff]
      %v978 = vld [vmem:[%s241 + $0x578] sm:$0xff]
      %v979 = vld [vmem:[%s241 + $0x580] sm:$0xff]
      %v980 = vld [vmem:[%s241 + $0x588] sm:$0xff]
      %v981 = vld [vmem:[%s241 + $0x590] sm:$0xff]
      %v982 = vld [vmem:[%s241 + $0x598] sm:$0xff]
      %v983 = vld [vmem:[%s241 + $0x5a0] sm:$0xff]
      %v984 = vld [vmem:[%s241 + $0x5a8] sm:$0xff]
      %v985 = vld [vmem:[%s241 + $0x5b0] sm:$0xff]
      %v986 = vld [vmem:[%s241 + $0x5b8] sm:$0xff]
      %v987 = vld [vmem:[%s241 + $0x5c0] sm:$0xff]
      %v988 = vld [vmem:[%s241 + $0x5c8] sm:$0xff]
      %v989 = vld [vmem:[%s241 + $0x5d0] sm:$0xff]
      %v990 = vld [vmem:[%s241 + $0x5d8] sm:$0xff]
      %v991 = vld [vmem:[%s241 + $0x5e0] sm:$0xff]
      %v992 = vld [vmem:[%s241 + $0x5e8] sm:$0xff]
      %v993 = vld [vmem:[%s241 + $0x5f0] sm:$0xff]
      %v994 = vld [vmem:[%s241 + $0x5f8] sm:$0xff]
      %v995 = vld [vmem:[%s241 + $0x600] sm:$0xff]
      %v996 = vld [vmem:[%s241 + $0x608] sm:$0xff]
      %v997 = vld [vmem:[%s241 + $0x610] sm:$0xff]
      %v998 = vld [vmem:[%s241 + $0x618] sm:$0xff]
      %v999 = vld [vmem:[%s241 + $0x620] sm:$0xff]
      %v1000 = vld [vmem:[%s241 + $0x628] sm:$0xff]
      %v1001 = vld [vmem:[%s241 + $0x630] sm:$0xff]
      %v1002 = vld [vmem:[%s241 + $0x638] sm:$0xff]
      %v1003 = vld [vmem:[%s241 + $0x640] sm:$0xff]
      %v1004 = vld [vmem:[%s241 + $0x648] sm:$0xff]
      %v1005 = vld [vmem:[%s241 + $0x650] sm:$0xff]
      %v1006 = vld [vmem:[%s241 + $0x658] sm:$0xff]
      %v1007 = vld [vmem:[%s241 + $0x660] sm:$0xff]
      %v1008 = vld [vmem:[%s241 + $0x668] sm:$0xff]
      %v1009 = vld [vmem:[%s241 + $0x670] sm:$0xff]
      %v1010 = vld [vmem:[%s241 + $0x678] sm:$0xff]
      %v1011 = vld [vmem:[%s241 + $0x680] sm:$0xff]
      %v1012 = vld [vmem:[%s241 + $0x688] sm:$0xff]
      %1014 = vset.pattern.permute.xlu0 0
      %1015 = vperm.xlu0 %1014, %v744
      %v1016 = vpop.permute.xlu0 %1015
      %1019 = vset.pattern.permute.xlu0 0
      %1020 = vperm.xlu0 %1019, %v746
      %v1021 = vpop.permute.xlu0 %1020
      %1024 = vset.pattern.permute.xlu0 0
      %1025 = vperm.xlu0 %1024, %v748
      %v1026 = vpop.permute.xlu0 %1025
      %1029 = vset.pattern.permute.xlu0 0
      %1030 = vperm.xlu0 %1029, %v750
      %v1031 = vpop.permute.xlu0 %1030
      %1034 = vset.pattern.permute.xlu0 0
      %1035 = vperm.xlu0 %1034, %v752
      %v1036 = vpop.permute.xlu0 %1035
      %1039 = vset.pattern.permute.xlu0 0
      %1040 = vperm.xlu0 %1039, %v754
      %v1041 = vpop.permute.xlu0 %1040
      %1044 = vset.pattern.permute.xlu0 0
      %1045 = vperm.xlu0 %1044, %v756
      %v1046 = vpop.permute.xlu0 %1045
      %1049 = vset.pattern.permute.xlu0 0
      %1050 = vperm.xlu0 %1049, %v758
      %v1051 = vpop.permute.xlu0 %1050
      %1054 = vset.pattern.permute.xlu0 0
      %1055 = vperm.xlu0 %1054, %v760
      %v1056 = vpop.permute.xlu0 %1055
      %1059 = vset.pattern.permute.xlu0 0
      %1060 = vperm.xlu0 %1059, %v762
      %v1061 = vpop.permute.xlu0 %1060
      %1064 = vset.pattern.permute.xlu0 0
      %1065 = vperm.xlu0 %1064, %v764
      %v1066 = vpop.permute.xlu0 %1065
      %1069 = vset.pattern.permute.xlu0 0
      %1070 = vperm.xlu0 %1069, %v766
      %v1071 = vpop.permute.xlu0 %1070
      %1074 = vset.pattern.permute.xlu0 0
      %1075 = vperm.xlu0 %1074, %v768
      %v1076 = vpop.permute.xlu0 %1075
      %1079 = vset.pattern.permute.xlu0 0
      %1080 = vperm.xlu0 %1079, %v770
      %v1081 = vpop.permute.xlu0 %1080
      %1084 = vset.pattern.permute.xlu0 0
      %1085 = vperm.xlu0 %1084, %v772
      %v1086 = vpop.permute.xlu0 %1085
      %1089 = vset.pattern.permute.xlu0 0
      %1090 = vperm.xlu0 %1089, %v774
      %v1091 = vpop.permute.xlu0 %1090
      %1094 = vset.pattern.permute.xlu0 0
      %1095 = vperm.xlu0 %1094, %v776
      %v1096 = vpop.permute.xlu0 %1095
      %1099 = vset.pattern.permute.xlu0 0
      %1100 = vperm.xlu0 %1099, %v778
      %v1101 = vpop.permute.xlu0 %1100
      %1104 = vset.pattern.permute.xlu0 0
      %1105 = vperm.xlu0 %1104, %v780
      %v1106 = vpop.permute.xlu0 %1105
      %1109 = vset.pattern.permute.xlu0 0
      %1110 = vperm.xlu0 %1109, %v782
      %v1111 = vpop.permute.xlu0 %1110
      %1114 = vset.pattern.permute.xlu0 0
      %1115 = vperm.xlu0 %1114, %v784
      %v1116 = vpop.permute.xlu0 %1115
      %1119 = vset.pattern.permute.xlu0 0
      %1120 = vperm.xlu0 %1119, %v786
      %v1121 = vpop.permute.xlu0 %1120
      %1124 = vset.pattern.permute.xlu0 0
      %1125 = vperm.xlu0 %1124, %v788
      %v1126 = vpop.permute.xlu0 %1125
      %1129 = vset.pattern.permute.xlu0 0
      %1130 = vperm.xlu0 %1129, %v790
      %v1131 = vpop.permute.xlu0 %1130
      %1134 = vset.pattern.permute.xlu0 0
      %1135 = vperm.xlu0 %1134, %v792
      %v1136 = vpop.permute.xlu0 %1135
      %1139 = vset.pattern.permute.xlu0 0
      %1140 = vperm.xlu0 %1139, %v794
      %v1141 = vpop.permute.xlu0 %1140
      %1144 = vset.pattern.permute.xlu0 0
      %1145 = vperm.xlu0 %1144, %v796
      %v1146 = vpop.permute.xlu0 %1145
      %1149 = vset.pattern.permute.xlu0 0
      %1150 = vperm.xlu0 %1149, %v798
      %v1151 = vpop.permute.xlu0 %1150
      %1154 = vset.pattern.permute.xlu0 0
      %1155 = vperm.xlu0 %1154, %v800
      %v1156 = vpop.permute.xlu0 %1155
      %1159 = vset.pattern.permute.xlu0 0
      %1160 = vperm.xlu0 %1159, %v802
      %v1161 = vpop.permute.xlu0 %1160
      %v1163 = vmul.f32 %v1016, %v803
      %v1164 = vmul.f32 %v1016, %v804
      %v1165 = vmul.f32 %v1016, %v805
      %v1166 = vmul.f32 %v1016, %v806
      %v1167 = vmul.f32 %v1016, %v807
      %v1168 = vmul.f32 %v1016, %v808
      %v1169 = vmul.f32 %v1016, %v809
      %v1170 = vmul.f32 %v1021, %v810
      %v1171 = vmul.f32 %v1021, %v811
      %v1172 = vmul.f32 %v1021, %v812
      %v1173 = vmul.f32 %v1021, %v813
      %v1174 = vmul.f32 %v1021, %v814
      %v1175 = vmul.f32 %v1021, %v815
      %v1176 = vmul.f32 %v1021, %v816
      %v1177 = vmul.f32 %v1026, %v817
      %v1178 = vmul.f32 %v1026, %v818
      %v1179 = vmul.f32 %v1026, %v819
      %v1180 = vmul.f32 %v1026, %v820
      %v1181 = vmul.f32 %v1026, %v821
      %v1182 = vmul.f32 %v1026, %v822
      %v1183 = vmul.f32 %v1026, %v823
      %v1184 = vmul.f32 %v1031, %v824
      %v1185 = vmul.f32 %v1031, %v825
      %v1186 = vmul.f32 %v1031, %v826
      %v1187 = vmul.f32 %v1031, %v827
      %v1188 = vmul.f32 %v1031, %v828
      %v1189 = vmul.f32 %v1031, %v829
      %v1190 = vmul.f32 %v1031, %v830
      %v1191 = vmul.f32 %v1036, %v831
      %v1192 = vmul.f32 %v1036, %v832
      %v1193 = vmul.f32 %v1036, %v833
      %v1194 = vmul.f32 %v1036, %v834
      %v1195 = vmul.f32 %v1036, %v835
      %v1196 = vmul.f32 %v1036, %v836
      %v1197 = vmul.f32 %v1036, %v837
      %v1198 = vmul.f32 %v1041, %v838
      %v1199 = vmul.f32 %v1041, %v839
      %v1200 = vmul.f32 %v1041, %v840
      %v1201 = vmul.f32 %v1041, %v841
      %v1202 = vmul.f32 %v1041, %v842
      %v1203 = vmul.f32 %v1041, %v843
      %v1204 = vmul.f32 %v1041, %v844
      %v1205 = vmul.f32 %v1046, %v845
      %v1206 = vmul.f32 %v1046, %v846
      %v1207 = vmul.f32 %v1046, %v847
      %v1208 = vmul.f32 %v1046, %v848
      %v1209 = vmul.f32 %v1046, %v849
      %v1210 = vmul.f32 %v1046, %v850
      %v1211 = vmul.f32 %v1046, %v851
      %v1212 = vmul.f32 %v1051, %v852
      %v1213 = vmul.f32 %v1051, %v853
      %v1214 = vmul.f32 %v1051, %v854
      %v1215 = vmul.f32 %v1051, %v855
      %v1216 = vmul.f32 %v1051, %v856
      %v1217 = vmul.f32 %v1051, %v857
      %v1218 = vmul.f32 %v1051, %v858
      %v1219 = vmul.f32 %v1056, %v859
      %v1220 = vmul.f32 %v1056, %v860
      %v1221 = vmul.f32 %v1056, %v861
      %v1222 = vmul.f32 %v1056, %v862
      %v1223 = vmul.f32 %v1056, %v863
      %v1224 = vmul.f32 %v1056, %v864
      %v1225 = vmul.f32 %v1056, %v865
      %v1226 = vmul.f32 %v1061, %v866
      %v1227 = vmul.f32 %v1061, %v867
      %v1228 = vmul.f32 %v1061, %v868
      %v1229 = vmul.f32 %v1061, %v869
      %v1230 = vmul.f32 %v1061, %v870
      %v1231 = vmul.f32 %v1061, %v871
      %v1232 = vmul.f32 %v1061, %v872
      %v1233 = vmul.f32 %v1066, %v873
      %v1234 = vmul.f32 %v1066, %v874
      %v1235 = vmul.f32 %v1066, %v875
      %v1236 = vmul.f32 %v1066, %v876
      %v1237 = vmul.f32 %v1066, %v877
      %v1238 = vmul.f32 %v1066, %v878
      %v1239 = vmul.f32 %v1066, %v879
      %v1240 = vmul.f32 %v1071, %v880
      %v1241 = vmul.f32 %v1071, %v881
      %v1242 = vmul.f32 %v1071, %v882
      %v1243 = vmul.f32 %v1071, %v883
      %v1244 = vmul.f32 %v1071, %v884
      %v1245 = vmul.f32 %v1071, %v885
      %v1246 = vmul.f32 %v1071, %v886
      %v1247 = vmul.f32 %v1076, %v887
      %v1248 = vmul.f32 %v1076, %v888
      %v1249 = vmul.f32 %v1076, %v889
      %v1250 = vmul.f32 %v1076, %v890
      %v1251 = vmul.f32 %v1076, %v891
      %v1252 = vmul.f32 %v1076, %v892
      %v1253 = vmul.f32 %v1076, %v893
      %v1254 = vmul.f32 %v1081, %v894
      %v1255 = vmul.f32 %v1081, %v895
      %v1256 = vmul.f32 %v1081, %v896
      %v1257 = vmul.f32 %v1081, %v897
      %v1258 = vmul.f32 %v1081, %v898
      %v1259 = vmul.f32 %v1081, %v899
      %v1260 = vmul.f32 %v1081, %v900
      %v1261 = vmul.f32 %v1086, %v901
      %v1262 = vmul.f32 %v1086, %v902
      %v1263 = vmul.f32 %v1086, %v903
      %v1264 = vmul.f32 %v1086, %v904
      %v1265 = vmul.f32 %v1086, %v905
      %v1266 = vmul.f32 %v1086, %v906
      %v1267 = vmul.f32 %v1086, %v907
      %v1268 = vmul.f32 %v1091, %v908
      %v1269 = vmul.f32 %v1091, %v909
      %v1270 = vmul.f32 %v1091, %v910
      %v1271 = vmul.f32 %v1091, %v911
      %v1272 = vmul.f32 %v1091, %v912
      %v1273 = vmul.f32 %v1091, %v913
      %v1274 = vmul.f32 %v1091, %v914
      %v1275 = vmul.f32 %v1096, %v915
      %v1276 = vmul.f32 %v1096, %v916
      %v1277 = vmul.f32 %v1096, %v917
      %v1278 = vmul.f32 %v1096, %v918
      %v1279 = vmul.f32 %v1096, %v919
      %v1280 = vmul.f32 %v1096, %v920
      %v1281 = vmul.f32 %v1096, %v921
      %v1282 = vmul.f32 %v1101, %v922
      %v1283 = vmul.f32 %v1101, %v923
      %v1284 = vmul.f32 %v1101, %v924
      %v1285 = vmul.f32 %v1101, %v925
      %v1286 = vmul.f32 %v1101, %v926
      %v1287 = vmul.f32 %v1101, %v927
      %v1288 = vmul.f32 %v1101, %v928
      %v1289 = vmul.f32 %v1106, %v929
      %v1290 = vmul.f32 %v1106, %v930
      %v1291 = vmul.f32 %v1106, %v931
      %v1292 = vmul.f32 %v1106, %v932
      %v1293 = vmul.f32 %v1106, %v933
      %v1294 = vmul.f32 %v1106, %v934
      %v1295 = vmul.f32 %v1106, %v935
      %v1296 = vmul.f32 %v1111, %v936
      %v1297 = vmul.f32 %v1111, %v937
      %v1298 = vmul.f32 %v1111, %v938
      %v1299 = vmul.f32 %v1111, %v939
      %v1300 = vmul.f32 %v1111, %v940
      %v1301 = vmul.f32 %v1111, %v941
      %v1302 = vmul.f32 %v1111, %v942
      %v1303 = vmul.f32 %v1116, %v943
      %v1304 = vmul.f32 %v1116, %v944
      %v1305 = vmul.f32 %v1116, %v945
      %v1306 = vmul.f32 %v1116, %v946
      %v1307 = vmul.f32 %v1116, %v947
      %v1308 = vmul.f32 %v1116, %v948
      %v1309 = vmul.f32 %v1116, %v949
      %v1310 = vmul.f32 %v1121, %v950
      %v1311 = vmul.f32 %v1121, %v951
      %v1312 = vmul.f32 %v1121, %v952
      %v1313 = vmul.f32 %v1121, %v953
      %v1314 = vmul.f32 %v1121, %v954
      %v1315 = vmul.f32 %v1121, %v955
      %v1316 = vmul.f32 %v1121, %v956
      %v1317 = vmul.f32 %v1126, %v957
      %v1318 = vmul.f32 %v1126, %v958
      %v1319 = vmul.f32 %v1126, %v959
      %v1320 = vmul.f32 %v1126, %v960
      %v1321 = vmul.f32 %v1126, %v961
      %v1322 = vmul.f32 %v1126, %v962
      %v1323 = vmul.f32 %v1126, %v963
      %v1324 = vmul.f32 %v1131, %v964
      %v1325 = vmul.f32 %v1131, %v965
      %v1326 = vmul.f32 %v1131, %v966
      %v1327 = vmul.f32 %v1131, %v967
      %v1328 = vmul.f32 %v1131, %v968
      %v1329 = vmul.f32 %v1131, %v969
      %v1330 = vmul.f32 %v1131, %v970
      %v1331 = vmul.f32 %v1136, %v971
      %v1332 = vmul.f32 %v1136, %v972
      %v1333 = vmul.f32 %v1136, %v973
      %v1334 = vmul.f32 %v1136, %v974
      %v1335 = vmul.f32 %v1136, %v975
      %v1336 = vmul.f32 %v1136, %v976
      %v1337 = vmul.f32 %v1136, %v977
      %v1338 = vmul.f32 %v1141, %v978
      %v1339 = vmul.f32 %v1141, %v979
      %v1340 = vmul.f32 %v1141, %v980
      %v1341 = vmul.f32 %v1141, %v981
      %v1342 = vmul.f32 %v1141, %v982
      %v1343 = vmul.f32 %v1141, %v983
      %v1344 = vmul.f32 %v1141, %v984
      %v1345 = vmul.f32 %v1146, %v985
      %v1346 = vmul.f32 %v1146, %v986
      %v1347 = vmul.f32 %v1146, %v987
      %v1348 = vmul.f32 %v1146, %v988
      %v1349 = vmul.f32 %v1146, %v989
      %v1350 = vmul.f32 %v1146, %v990
      %v1351 = vmul.f32 %v1146, %v991
      %v1352 = vmul.f32 %v1151, %v992
      %v1353 = vmul.f32 %v1151, %v993
      %v1354 = vmul.f32 %v1151, %v994
      %v1355 = vmul.f32 %v1151, %v995
      %v1356 = vmul.f32 %v1151, %v996
      %v1357 = vmul.f32 %v1151, %v997
      %v1358 = vmul.f32 %v1151, %v998
      %v1359 = vmul.f32 %v1156, %v999
      %v1360 = vmul.f32 %v1156, %v1000
      %v1361 = vmul.f32 %v1156, %v1001
      %v1362 = vmul.f32 %v1156, %v1002
      %v1363 = vmul.f32 %v1156, %v1003
      %v1364 = vmul.f32 %v1156, %v1004
      %v1365 = vmul.f32 %v1156, %v1005
      %v1366 = vmul.f32 %v1161, %v1006
      %v1367 = vmul.f32 %v1161, %v1007
      %v1368 = vmul.f32 %v1161, %v1008
      %v1369 = vmul.f32 %v1161, %v1009
      %v1370 = vmul.f32 %v1161, %v1010
      %v1371 = vmul.f32 %v1161, %v1011
      %v1372 = vmul.f32 %v1161, %v1012
      %1373 = vst [vmem:[%s248] sm:$0xff] %v1163
      %1374 = vst [vmem:[%s248 + $0x8] sm:$0xff] %v1164
      %1375 = vst [vmem:[%s248 + $0x10] sm:$0xff] %v1165
      %1376 = vst [vmem:[%s248 + $0x18] sm:$0xff] %v1166
      %1377 = vst [vmem:[%s248 + $0x20] sm:$0xff] %v1167
      %1378 = vst [vmem:[%s248 + $0x28] sm:$0xff] %v1168
      %vm1379 = vcmask 130048
      %1380 = vst.msk [vmem:[%s248 + $0x30] sm:$0xff] %vm1379, %v1169
      %1381 = vst [vmem:[%s248 + $0x38] sm:$0xff] %v1170
      %1382 = vst [vmem:[%s248 + $0x40] sm:$0xff] %v1171
      %1383 = vst [vmem:[%s248 + $0x48] sm:$0xff] %v1172
      %1384 = vst [vmem:[%s248 + $0x50] sm:$0xff] %v1173
      %1385 = vst [vmem:[%s248 + $0x58] sm:$0xff] %v1174
      %1386 = vst [vmem:[%s248 + $0x60] sm:$0xff] %v1175
      %1387 = vst.msk [vmem:[%s248 + $0x68] sm:$0xff] %vm1379, %v1176
      %1388 = vst [vmem:[%s248 + $0x70] sm:$0xff] %v1177
      %1389 = vst [vmem:[%s248 + $0x78] sm:$0xff] %v1178
      %1390 = vst [vmem:[%s248 + $0x80] sm:$0xff] %v1179
      %1391 = vst [vmem:[%s248 + $0x88] sm:$0xff] %v1180
      %1392 = vst [vmem:[%s248 + $0x90] sm:$0xff] %v1181
      %1393 = vst [vmem:[%s248 + $0x98] sm:$0xff] %v1182
      %1394 = vst.msk [vmem:[%s248 + $0xa0] sm:$0xff] %vm1379, %v1183
      %1395 = vst [vmem:[%s248 + $0xa8] sm:$0xff] %v1184
      %1396 = vst [vmem:[%s248 + $0xb0] sm:$0xff] %v1185
      %1397 = vst [vmem:[%s248 + $0xb8] sm:$0xff] %v1186
      %1398 = vst [vmem:[%s248 + $0xc0] sm:$0xff] %v1187
      %1399 = vst [vmem:[%s248 + $0xc8] sm:$0xff] %v1188
      %1400 = vst [vmem:[%s248 + $0xd0] sm:$0xff] %v1189
      %1401 = vst.msk [vmem:[%s248 + $0xd8] sm:$0xff] %vm1379, %v1190
      %1402 = vst [vmem:[%s248 + $0xe0] sm:$0xff] %v1191
      %1403 = vst [vmem:[%s248 + $0xe8] sm:$0xff] %v1192
      %1404 = vst [vmem:[%s248 + $0xf0] sm:$0xff] %v1193
      %1405 = vst [vmem:[%s248 + $0xf8] sm:$0xff] %v1194
      %1406 = vst [vmem:[%s248 + $0x100] sm:$0xff] %v1195
      %1407 = vst [vmem:[%s248 + $0x108] sm:$0xff] %v1196
      %1408 = vst.msk [vmem:[%s248 + $0x110] sm:$0xff] %vm1379, %v1197
      %1409 = vst [vmem:[%s248 + $0x118] sm:$0xff] %v1198
      %1410 = vst [vmem:[%s248 + $0x120] sm:$0xff] %v1199
      %1411 = vst [vmem:[%s248 + $0x128] sm:$0xff] %v1200
      %1412 = vst [vmem:[%s248 + $0x130] sm:$0xff] %v1201
      %1413 = vst [vmem:[%s248 + $0x138] sm:$0xff] %v1202
      %1414 = vst [vmem:[%s248 + $0x140] sm:$0xff] %v1203
      %1415 = vst.msk [vmem:[%s248 + $0x148] sm:$0xff] %vm1379, %v1204
      %1416 = vst [vmem:[%s248 + $0x150] sm:$0xff] %v1205
      %1417 = vst [vmem:[%s248 + $0x158] sm:$0xff] %v1206
      %1418 = vst [vmem:[%s248 + $0x160] sm:$0xff] %v1207
      %1419 = vst [vmem:[%s248 + $0x168] sm:$0xff] %v1208
      %1420 = vst [vmem:[%s248 + $0x170] sm:$0xff] %v1209
      %1421 = vst [vmem:[%s248 + $0x178] sm:$0xff] %v1210
      %1422 = vst.msk [vmem:[%s248 + $0x180] sm:$0xff] %vm1379, %v1211
      %1423 = vst [vmem:[%s248 + $0x188] sm:$0xff] %v1212
      %1424 = vst [vmem:[%s248 + $0x190] sm:$0xff] %v1213
      %1425 = vst [vmem:[%s248 + $0x198] sm:$0xff] %v1214
      %1426 = vst [vmem:[%s248 + $0x1a0] sm:$0xff] %v1215
      %1427 = vst [vmem:[%s248 + $0x1a8] sm:$0xff] %v1216
      %1428 = vst [vmem:[%s248 + $0x1b0] sm:$0xff] %v1217
      %1429 = vst.msk [vmem:[%s248 + $0x1b8] sm:$0xff] %vm1379, %v1218
      %1430 = vst [vmem:[%s248 + $0x1c0] sm:$0xff] %v1219
      %1431 = vst [vmem:[%s248 + $0x1c8] sm:$0xff] %v1220
      %1432 = vst [vmem:[%s248 + $0x1d0] sm:$0xff] %v1221
      %1433 = vst [vmem:[%s248 + $0x1d8] sm:$0xff] %v1222
      %1434 = vst [vmem:[%s248 + $0x1e0] sm:$0xff] %v1223
      %1435 = vst [vmem:[%s248 + $0x1e8] sm:$0xff] %v1224
      %1436 = vst.msk [vmem:[%s248 + $0x1f0] sm:$0xff] %vm1379, %v1225
      %1437 = vst [vmem:[%s248 + $0x1f8] sm:$0xff] %v1226
      %1438 = vst [vmem:[%s248 + $0x200] sm:$0xff] %v1227
      %1439 = vst [vmem:[%s248 + $0x208] sm:$0xff] %v1228
      %1440 = vst [vmem:[%s248 + $0x210] sm:$0xff] %v1229
      %1441 = vst [vmem:[%s248 + $0x218] sm:$0xff] %v1230
      %1442 = vst [vmem:[%s248 + $0x220] sm:$0xff] %v1231
      %1443 = vst.msk [vmem:[%s248 + $0x228] sm:$0xff] %vm1379, %v1232
      %1444 = vst [vmem:[%s248 + $0x230] sm:$0xff] %v1233
      %1445 = vst [vmem:[%s248 + $0x238] sm:$0xff] %v1234
      %1446 = vst [vmem:[%s248 + $0x240] sm:$0xff] %v1235
      %1447 = vst [vmem:[%s248 + $0x248] sm:$0xff] %v1236
      %1448 = vst [vmem:[%s248 + $0x250] sm:$0xff] %v1237
      %1449 = vst [vmem:[%s248 + $0x258] sm:$0xff] %v1238
      %1450 = vst.msk [vmem:[%s248 + $0x260] sm:$0xff] %vm1379, %v1239
      %1451 = vst [vmem:[%s248 + $0x268] sm:$0xff] %v1240
      %1452 = vst [vmem:[%s248 + $0x270] sm:$0xff] %v1241
      %1453 = vst [vmem:[%s248 + $0x278] sm:$0xff] %v1242
      %1454 = vst [vmem:[%s248 + $0x280] sm:$0xff] %v1243
      %1455 = vst [vmem:[%s248 + $0x288] sm:$0xff] %v1244
      %1456 = vst [vmem:[%s248 + $0x290] sm:$0xff] %v1245
      %1457 = vst.msk [vmem:[%s248 + $0x298] sm:$0xff] %vm1379, %v1246
      %1458 = vst [vmem:[%s248 + $0x2a0] sm:$0xff] %v1247
      %1459 = vst [vmem:[%s248 + $0x2a8] sm:$0xff] %v1248
      %1460 = vst [vmem:[%s248 + $0x2b0] sm:$0xff] %v1249
      %1461 = vst [vmem:[%s248 + $0x2b8] sm:$0xff] %v1250
      %1462 = vst [vmem:[%s248 + $0x2c0] sm:$0xff] %v1251
      %1463 = vst [vmem:[%s248 + $0x2c8] sm:$0xff] %v1252
      %1464 = vst.msk [vmem:[%s248 + $0x2d0] sm:$0xff] %vm1379, %v1253
      %1465 = vst [vmem:[%s248 + $0x2d8] sm:$0xff] %v1254
      %1466 = vst [vmem:[%s248 + $0x2e0] sm:$0xff] %v1255
      %1467 = vst [vmem:[%s248 + $0x2e8] sm:$0xff] %v1256
      %1468 = vst [vmem:[%s248 + $0x2f0] sm:$0xff] %v1257
      %1469 = vst [vmem:[%s248 + $0x2f8] sm:$0xff] %v1258
      %1470 = vst [vmem:[%s248 + $0x300] sm:$0xff] %v1259
      %1471 = vst.msk [vmem:[%s248 + $0x308] sm:$0xff] %vm1379, %v1260
      %1472 = vst [vmem:[%s248 + $0x310] sm:$0xff] %v1261
      %1473 = vst [vmem:[%s248 + $0x318] sm:$0xff] %v1262
      %1474 = vst [vmem:[%s248 + $0x320] sm:$0xff] %v1263
      %1475 = vst [vmem:[%s248 + $0x328] sm:$0xff] %v1264
      %1476 = vst [vmem:[%s248 + $0x330] sm:$0xff] %v1265
      %1477 = vst [vmem:[%s248 + $0x338] sm:$0xff] %v1266
      %1478 = vst.msk [vmem:[%s248 + $0x340] sm:$0xff] %vm1379, %v1267
      %1479 = vst [vmem:[%s248 + $0x348] sm:$0xff] %v1268
      %1480 = vst [vmem:[%s248 + $0x350] sm:$0xff] %v1269
      %1481 = vst [vmem:[%s248 + $0x358] sm:$0xff] %v1270
      %1482 = vst [vmem:[%s248 + $0x360] sm:$0xff] %v1271
      %1483 = vst [vmem:[%s248 + $0x368] sm:$0xff] %v1272
      %1484 = vst [vmem:[%s248 + $0x370] sm:$0xff] %v1273
      %1485 = vst.msk [vmem:[%s248 + $0x378] sm:$0xff] %vm1379, %v1274
      %1486 = vst [vmem:[%s248 + $0x380] sm:$0xff] %v1275
      %1487 = vst [vmem:[%s248 + $0x388] sm:$0xff] %v1276
      %1488 = vst [vmem:[%s248 + $0x390] sm:$0xff] %v1277
      %1489 = vst [vmem:[%s248 + $0x398] sm:$0xff] %v1278
      %1490 = vst [vmem:[%s248 + $0x3a0] sm:$0xff] %v1279
      %1491 = vst [vmem:[%s248 + $0x3a8] sm:$0xff] %v1280
      %1492 = vst.msk [vmem:[%s248 + $0x3b0] sm:$0xff] %vm1379, %v1281
      %1493 = vst [vmem:[%s248 + $0x3b8] sm:$0xff] %v1282
      %1494 = vst [vmem:[%s248 + $0x3c0] sm:$0xff] %v1283
      %1495 = vst [vmem:[%s248 + $0x3c8] sm:$0xff] %v1284
      %1496 = vst [vmem:[%s248 + $0x3d0] sm:$0xff] %v1285
      %1497 = vst [vmem:[%s248 + $0x3d8] sm:$0xff] %v1286
      %1498 = vst [vmem:[%s248 + $0x3e0] sm:$0xff] %v1287
      %1499 = vst.msk [vmem:[%s248 + $0x3e8] sm:$0xff] %vm1379, %v1288
      %1500 = vst [vmem:[%s248 + $0x3f0] sm:$0xff] %v1289
      %1501 = vst [vmem:[%s248 + $0x3f8] sm:$0xff] %v1290
      %1502 = vst [vmem:[%s248 + $0x400] sm:$0xff] %v1291
      %1503 = vst [vmem:[%s248 + $0x408] sm:$0xff] %v1292
      %1504 = vst [vmem:[%s248 + $0x410] sm:$0xff] %v1293
      %1505 = vst [vmem:[%s248 + $0x418] sm:$0xff] %v1294
      %1506 = vst.msk [vmem:[%s248 + $0x420] sm:$0xff] %vm1379, %v1295
      %1507 = vst [vmem:[%s248 + $0x428] sm:$0xff] %v1296
      %1508 = vst [vmem:[%s248 + $0x430] sm:$0xff] %v1297
      %1509 = vst [vmem:[%s248 + $0x438] sm:$0xff] %v1298
      %1510 = vst [vmem:[%s248 + $0x440] sm:$0xff] %v1299
      %1511 = vst [vmem:[%s248 + $0x448] sm:$0xff] %v1300
      %1512 = vst [vmem:[%s248 + $0x450] sm:$0xff] %v1301
      %1513 = vst.msk [vmem:[%s248 + $0x458] sm:$0xff] %vm1379, %v1302
      %1514 = vst [vmem:[%s248 + $0x460] sm:$0xff] %v1303
      %1515 = vst [vmem:[%s248 + $0x468] sm:$0xff] %v1304
      %1516 = vst [vmem:[%s248 + $0x470] sm:$0xff] %v1305
      %1517 = vst [vmem:[%s248 + $0x478] sm:$0xff] %v1306
      %1518 = vst [vmem:[%s248 + $0x480] sm:$0xff] %v1307
      %1519 = vst [vmem:[%s248 + $0x488] sm:$0xff] %v1308
      %1520 = vst.msk [vmem:[%s248 + $0x490] sm:$0xff] %vm1379, %v1309
      %1521 = vst [vmem:[%s248 + $0x498] sm:$0xff] %v1310
      %1522 = vst [vmem:[%s248 + $0x4a0] sm:$0xff] %v1311
      %1523 = vst [vmem:[%s248 + $0x4a8] sm:$0xff] %v1312
      %1524 = vst [vmem:[%s248 + $0x4b0] sm:$0xff] %v1313
      %1525 = vst [vmem:[%s248 + $0x4b8] sm:$0xff] %v1314
      %1526 = vst [vmem:[%s248 + $0x4c0] sm:$0xff] %v1315
      %1527 = vst.msk [vmem:[%s248 + $0x4c8] sm:$0xff] %vm1379, %v1316
      %1528 = vst [vmem:[%s248 + $0x4d0] sm:$0xff] %v1317
      %1529 = vst [vmem:[%s248 + $0x4d8] sm:$0xff] %v1318
      %1530 = vst [vmem:[%s248 + $0x4e0] sm:$0xff] %v1319
      %1531 = vst [vmem:[%s248 + $0x4e8] sm:$0xff] %v1320
      %1532 = vst [vmem:[%s248 + $0x4f0] sm:$0xff] %v1321
      %1533 = vst [vmem:[%s248 + $0x4f8] sm:$0xff] %v1322
      %1534 = vst.msk [vmem:[%s248 + $0x500] sm:$0xff] %vm1379, %v1323
      %1535 = vst [vmem:[%s248 + $0x508] sm:$0xff] %v1324
      %1536 = vst [vmem:[%s248 + $0x510] sm:$0xff] %v1325
      %1537 = vst [vmem:[%s248 + $0x518] sm:$0xff] %v1326
      %1538 = vst [vmem:[%s248 + $0x520] sm:$0xff] %v1327
      %1539 = vst [vmem:[%s248 + $0x528] sm:$0xff] %v1328
      %1540 = vst [vmem:[%s248 + $0x530] sm:$0xff] %v1329
      %1541 = vst.msk [vmem:[%s248 + $0x538] sm:$0xff] %vm1379, %v1330
      %1542 = vst [vmem:[%s248 + $0x540] sm:$0xff] %v1331
      %1543 = vst [vmem:[%s248 + $0x548] sm:$0xff] %v1332
      %1544 = vst [vmem:[%s248 + $0x550] sm:$0xff] %v1333
      %1545 = vst [vmem:[%s248 + $0x558] sm:$0xff] %v1334
      %1546 = vst [vmem:[%s248 + $0x560] sm:$0xff] %v1335
      %1547 = vst [vmem:[%s248 + $0x568] sm:$0xff] %v1336
      %1548 = vst.msk [vmem:[%s248 + $0x570] sm:$0xff] %vm1379, %v1337
      %1549 = vst [vmem:[%s248 + $0x578] sm:$0xff] %v1338
      %1550 = vst [vmem:[%s248 + $0x580] sm:$0xff] %v1339
      %1551 = vst [vmem:[%s248 + $0x588] sm:$0xff] %v1340
      %1552 = vst [vmem:[%s248 + $0x590] sm:$0xff] %v1341
      %1553 = vst [vmem:[%s248 + $0x598] sm:$0xff] %v1342
      %1554 = vst [vmem:[%s248 + $0x5a0] sm:$0xff] %v1343
      %1555 = vst.msk [vmem:[%s248 + $0x5a8] sm:$0xff] %vm1379, %v1344
      %1556 = vst [vmem:[%s248 + $0x5b0] sm:$0xff] %v1345
      %1557 = vst [vmem:[%s248 + $0x5b8] sm:$0xff] %v1346
      %1558 = vst [vmem:[%s248 + $0x5c0] sm:$0xff] %v1347
      %1559 = vst [vmem:[%s248 + $0x5c8] sm:$0xff] %v1348
      %1560 = vst [vmem:[%s248 + $0x5d0] sm:$0xff] %v1349
      %1561 = vst [vmem:[%s248 + $0x5d8] sm:$0xff] %v1350
      %1562 = vst.msk [vmem:[%s248 + $0x5e0] sm:$0xff] %vm1379, %v1351
      %1563 = vst [vmem:[%s248 + $0x5e8] sm:$0xff] %v1352
      %1564 = vst [vmem:[%s248 + $0x5f0] sm:$0xff] %v1353
      %1565 = vst [vmem:[%s248 + $0x5f8] sm:$0xff] %v1354
      %1566 = vst [vmem:[%s248 + $0x600] sm:$0xff] %v1355
      %1567 = vst [vmem:[%s248 + $0x608] sm:$0xff] %v1356
      %1568 = vst [vmem:[%s248 + $0x610] sm:$0xff] %v1357
      %1569 = vst.msk [vmem:[%s248 + $0x618] sm:$0xff] %vm1379, %v1358
      %1570 = vst [vmem:[%s248 + $0x620] sm:$0xff] %v1359
      %1571 = vst [vmem:[%s248 + $0x628] sm:$0xff] %v1360
      %1572 = vst [vmem:[%s248 + $0x630] sm:$0xff] %v1361
      %1573 = vst [vmem:[%s248 + $0x638] sm:$0xff] %v1362
      %1574 = vst [vmem:[%s248 + $0x640] sm:$0xff] %v1363
      %1575 = vst [vmem:[%s248 + $0x648] sm:$0xff] %v1364
      %1576 = vst.msk [vmem:[%s248 + $0x650] sm:$0xff] %vm1379, %v1365
      %1577 = vst [vmem:[%s248 + $0x658] sm:$0xff] %v1366
      %1578 = vst [vmem:[%s248 + $0x660] sm:$0xff] %v1367
      %1579 = vst [vmem:[%s248 + $0x668] sm:$0xff] %v1368
      %1580 = vst [vmem:[%s248 + $0x670] sm:$0xff] %v1369
      %1581 = vst [vmem:[%s248 + $0x678] sm:$0xff] %v1370
      %1582 = vst [vmem:[%s248 + $0x680] sm:$0xff] %v1371
      %1583 = vst.msk [vmem:[%s248 + $0x688] sm:$0xff] %vm1379, %v1372
      %s1584 = smul.u32 30, %s15
      %p1585 = scmp.lt.s32.totalorder %s1584, 59
      %s1586 = scalar_select %p1585, %s1584, 59
      %s1587 = smul.addr %s1586, 7
      %s1588 = smul.addr %s1587, 8
      %s1589 = scalar_lea.vmem %s4, %s1588
      // Predicated region
      $region37: #{tpu_custom_call.1} parent=35 // pred_check
        %p1590 = pneg %p132
      $region38: #{tpu_custom_call.1} parent=35 // pred_check_branch
        %1592 = sbr.rel (%p1590) target = $region40
      $region39: #{tpu_custom_call.1} parent=35 // pred_region
        %s1593 = smul.u32 30, %s15
      $region40: #{tpu_custom_call.1} parent=35 // pred_fallthru
        _
    $region36: #{tpu_custom_call.1} parent=5 // pred_fallthru
      _
    %p1594 = scmp.le.s32.totalorder 2, %s10
    // Predicated region
    $region41: #{tpu_custom_call.1} parent=5 // pred_check
      %p1595 = pneg %p1594
    $region42: #{tpu_custom_call.1} parent=5 // pred_check_branch
      %1597 = sbr.rel (%p1595) target = $region44
    $region43: #{tpu_custom_call.1} parent=5 // pred_region
      %s1598 = ssub.s32 %s10, 2
      // Predicated region
      $region45: #{tpu_custom_call.1} parent=43 // pred_check
        %p1599 = pneg %p138
      $region46: #{tpu_custom_call.1} parent=43 // pred_check_branch
        %1601 = sbr.rel (%p1599) target = $region48
      $region47: #{tpu_custom_call.1} parent=43 // pred_region
        %s1602 = smul.u32 30, %s16
        %p1603 = scmp.lt.s32.totalorder %s1602, 59
        %s1604 = scalar_select %p1603, %s1602, 59
        %s1605 = smul.addr %s1604, 7
        %s1606 = smul.addr %s1605, 8
        %s1607 = scalar_lea.vmem %s4, %s1606
      $region48: #{tpu_custom_call.1} parent=43 // pred_fallthru
        _
    $region44: #{tpu_custom_call.1} parent=5 // pred_fallthru
      _
  $region6: #{tpu_custom_call.1} parent=0 // loop_footer
    %s14 = sadd.s32 1, %s10
  $region7: #{tpu_custom_call.1} parent=0 // loop_footer_branch
    %9 = sbr.rel target = $region3
  $region8: #{tpu_custom_call.1} parent=0 // loop_exit
    _

</llo_original>
